<compile_context>
chip_gen: v7x
topology: tpu7x:2x2x1
jax: 0.10.0
libtpu: 0.0.40
codegen_flags: <defaults>
</compile_context>

<pallas_src>
import math
from functools import partial

import jax
import jax.numpy as jnp
from jax import lax
from jax.experimental import pallas as pl
from jax.experimental.pallas import tpu as pltpu


# --------------------------------------------------------------------------- #
# small config (shapes consistent with the module's __init__)
# --------------------------------------------------------------------------- #
BATCH = 2
SEQ = 8
HIDDEN = 32
NUM_HEADS = 4
HEAD_DIM = HIDDEN // NUM_HEADS
INTERMEDIATE = 64
NUM_LAYERS = 2
LN_EPS = 1e-12

N_VEC_ROWS = 8          # bqkv, bo, g1, be1, bi, b2, g2, be2


# --------------------------------------------------------------------------- #
# shared math helpers (used by the kernel and by the pure-JAX reference)
# --------------------------------------------------------------------------- #
def _gelu_tanh(x):
    # "gelu_new": 0.5*x*(1 + tanh(sqrt(2/pi)*(x + 0.044715*x^3)))
    return 0.5 * x * (1.0 + jnp.tanh(
        jnp.sqrt(2.0 / jnp.pi) * (x + 0.044715 * x * x * x)))


def _layernorm(x, gamma, beta, eps):
    mean = jnp.mean(x, axis=-1, keepdims=True)
    var = jnp.mean(jnp.square(x - mean), axis=-1, keepdims=True)
    return (x - mean) * lax.rsqrt(var + eps) * gamma + beta


# --------------------------------------------------------------------------- #
# fused BertEncoder kernel: grid = (batch, layer), hidden carried in out_ref
# --------------------------------------------------------------------------- #
def bert_encoder_kernel(h_ref, mask_ref, wqkv_ref, woh_ref, wi_ref, w2_ref,
                        vec_ref, out_ref, saved_ref,
                        *, num_heads, head_dim, eps):
    l = pl.program_id(1)

    # Layer 0: initialize the VMEM-resident hidden carry (out_ref) from HBM.
    @pl.when(l == 0)
    def _():
        out_ref[...] = h_ref[...]

    x = out_ref[0]                               # (S, H) pre-layer hidden
    S, H = x.shape

    # per-layer snapshot of the PRE-layer CLS row (hidden_states[:, 0])
    saved_ref[...] = x[0:1, :].reshape(1, 1, 1, H)

    mask = mask_ref[0]                           # (1, S) HF additive mask
    wqkv = wqkv_ref[0]                           # (H, 3H)
    woh = woh_ref[0]                             # (nh, dh, H)  per-head Wo
    wi = wi_ref[0]                               # (H, I)
    w2 = w2_ref[0]                               # (I, H)
    vecs = vec_ref[0]                            # (8, VPAD) packed bias/gamma/beta
    inter_dim = wi.shape[1]

    bqkv = vecs[0:1, :3 * H]                     # (1, 3H)
    bo = vecs[1:2, :H]
    g1 = vecs[2:3, :H]
    be1 = vecs[3:4, :H]
    bi = vecs[4:5, :inter_dim]
    b2 = vecs[5:6, :H]
    g2 = vecs[6:7, :H]
    be2 = vecs[7:8, :H]

    # --- BertSelfAttention: fused QKV projection (one K=H MXU matmul) ---
    qkv = jnp.dot(x, wqkv, preferred_element_type=jnp.float32) + bqkv   # (S, 3H)

    # Stack heads on a leading batch axis once, then all head matmuls / the
    # softmax run batched (no per-head score/ctx/proj Python loop).
    q = jnp.stack([qkv[:, hd * head_dim:(hd + 1) * head_dim]
                   for hd in range(num_heads)], axis=0)                 # (nh, S, dh)
    k = jnp.stack([qkv[:, H + hd * head_dim:H + (hd + 1) * head_dim]
                   for hd in range(num_heads)], axis=0)                 # (nh, S, dh)
    v = jnp.stack([qkv[:, 2 * H + hd * head_dim:2 * H + (hd + 1) * head_dim]
                   for hd in range(num_heads)], axis=0)                 # (nh, S, dh)

    s = jnp.einsum('hqd,hkd->hqk', q, k,
                   preferred_element_type=jnp.float32)                  # (nh, S, S)
    s = s * (1.0 / math.sqrt(head_dim)) + mask   # mask broadcasts over heads & rows
    s = s - jnp.max(s, axis=-1, keepdims=True)   # one stacked softmax for all heads
    p = jnp.exp(s)
    p = p / jnp.sum(p, axis=-1, keepdims=True)   # exact division
    # attention-probs dropout is identity in eval mode

    ctx = jnp.einsum('hqk,hkd->hqd', p, v,
                     preferred_element_type=jnp.float32)                # (nh, S, dh)
    # fold the lane-concat of heads into the output projection:
    # ctx @ Wo == sum_h ctx_h @ Wo[h]   (batched matmul + cheap leading-axis sum)
    attn = jnp.sum(jnp.einsum('hqd,hde->hqe', ctx, woh,
                              preferred_element_type=jnp.float32), axis=0)  # (S, H)
    attn = attn + bo

    # --- BertSelfOutput: bias + residual + LayerNorm ---
    x1 = _layernorm(attn + x, g1, be1, eps)

    # --- BertIntermediate: dense + GELU ---
    y = _gelu_tanh(jnp.dot(x1, wi, preferred_element_type=jnp.float32) + bi)

    # --- BertOutput: dense + residual + LayerNorm ---
    z = jnp.dot(y, w2, preferred_element_type=jnp.float32) + b2
    out_ref[0] = _layernorm(z + x1, g2, be2, eps)   # carry to next layer in VMEM


# --------------------------------------------------------------------------- #
# parameter packing (wrapper side, pure JAX)
# --------------------------------------------------------------------------- #
def _pack_params(layer_params, vpad, num_heads):
    H = layer_params[0]["wq"].shape[0]
    dh = H // num_heads
    wqkv = jnp.stack([jnp.concatenate([p["wq"], p["wk"], p["wv"]], axis=1)
                      for p in layer_params])                  # (L, H, 3H)
    # Wo split per head on the wrapper side: (L, nh, dh, H)
    woh = jnp.stack([p["wo"].reshape(num_heads, dh, H) for p in layer_params])
    wi = jnp.stack([p["wi"] for p in layer_params])            # (L, H, I)
    w2 = jnp.stack([p["w2"] for p in layer_params])            # (L, I, H)

    def pad_row(v):
        v = v.reshape(1, -1)
        return jnp.pad(v, ((0, 0), (0, vpad - v.shape[1])))

    vec_layers = []
    for p in layer_params:
        rows = [jnp.concatenate([p["bq"], p["bk"], p["bv"]], axis=1),
                p["bo"], p["g1"], p["be1"], p["bi"], p["b2"], p["g2"], p["be2"]]
        vec_layers.append(jnp.concatenate([pad_row(r) for r in rows], axis=0))
    vecs = jnp.stack(vec_layers)                               # (L, 8, VPAD)
    return wqkv, woh, wi, w2, vecs


# --------------------------------------------------------------------------- #
# encoder wrapper: one pallas_call for the whole stack
# --------------------------------------------------------------------------- #
def bert_encoder_pallas(hidden_states, attention_mask, layer_params, *,
                        num_heads, eps, save_hidden=False):
    B, S, H = hidden_states.shape
    L = len(layer_params)
    I = layer_params[0]["wi"].shape[1]
    dh = H // num_heads
    vpad = max(3 * H, I, H)

    wqkv, woh, wi, w2, vecs = _pack_params(layer_params, vpad, num_heads)
    h = hidden_states.astype(jnp.float32)
    # HF additive mask (B, 1, 1, S) -> (B, 1, S); applied per batch element.
    mask = attention_mask.reshape(B, 1, S).astype(jnp.float32)

    kernel = partial(bert_encoder_kernel, num_heads=num_heads,
                     head_dim=dh, eps=eps)

    grid_spec = pltpu.PrefetchScalarGridSpec(
        num_scalar_prefetch=0,
        grid=(B, L),                                           # batch x layer
        in_specs=[
            # layer-invariant per-batch inputs: single-buffered (no useless 2x VMEM)
            pl.BlockSpec((1, S, H), lambda b, l: (b, 0, 0),
                         pipeline_mode=pl.Buffered(1)),        # hidden slab
            pl.BlockSpec((1, 1, S), lambda b, l: (b, 0, 0),
                         pipeline_mode=pl.Buffered(1)),        # additive mask
            # per-layer weights, pipelined along the layer axis
            pl.BlockSpec((1, H, 3 * H), lambda b, l: (l, 0, 0)),          # fused QKV
            pl.BlockSpec((1, num_heads, dh, H), lambda b, l: (l, 0, 0, 0)),  # Wo per head
            pl.BlockSpec((1, H, I), lambda b, l: (l, 0, 0)),              # Wi
            pl.BlockSpec((1, I, H), lambda b, l: (l, 0, 0)),              # W2
            pl.BlockSpec((1, N_VEC_ROWS, vpad), lambda b, l: (l, 0, 0)),  # packed vectors
        ],
        out_specs=(
            # constant block index along the layer axis -> VMEM-resident carry
            pl.BlockSpec((1, S, H), lambda b, l: (b, 0, 0)),
            # per-(batch, layer) CLS snapshot
            pl.BlockSpec((1, 1, 1, H), lambda b, l: (b, l, 0, 0)),
        ),
    )

    out, saved_raw = pl.pallas_call(
        kernel,
        out_shape=(jax.ShapeDtypeStruct((B, S, H), jnp.float32),
                   jax.ShapeDtypeStruct((B, L, 1, H), jnp.float32)),
        grid_spec=grid_spec,
        compiler_params=pltpu.CompilerParams(
            dimension_semantics=("parallel", "arbitrary"),     # batch parallel, layer carry
            vmem_limit_bytes=32 * 1024 * 1024),                # explicit; sweep at real sizes
    )(h, mask, wqkv, woh, wi, w2, vecs)

    saved_list = ([jnp.squeeze(saved_raw[:, i], axis=1) for i in range(L)]
                  if save_hidden else [])
    return out, saved_list


# --------------------------------------------------------------------------- #
# pure-JAX reference (same math) for correctness check
# --------------------------------------------------------------------------- #
def bert_layer_ref(h, attention_mask, p, num_heads, eps):
    B, S, H = h.shape
    dh = H // num_heads
    q = h @ p["wq"] + p["bq"]
    k = h @ p["wk"] + p["bk"]
    v = h @ p["wv"] + p["bv"]
    qh = q.reshape(B, S, num_heads, dh).transpose(0, 2, 1, 3)
    kh = k.reshape(B, S, num_heads, dh).transpose(0, 2, 1, 3)
    vh = v.reshape(B, S, num_heads, dh).transpose(0, 2, 1, 3)
    scores = jnp.einsum("bhqd,bhkd->bhqk", qh, kh) / math.sqrt(dh)
    scores = scores + attention_mask                    # (B,1,1,S) broadcast
    probs = jax.nn.softmax(scores, axis=-1)
    ctx = jnp.einsum("bhqk,bhkd->bhqd", probs, vh)
    ctx = ctx.transpose(0, 2, 1, 3).reshape(B, S, H)
    attn = ctx @ p["wo"] + p["bo"]
    x1 = _layernorm(attn + h, p["g1"], p["be1"], eps)
    inter = _gelu_tanh(x1 @ p["wi"] + p["bi"])
    out = inter @ p["w2"] + p["b2"]
    return _layernorm(out + x1, p["g2"], p["be2"], eps)


def bert_encoder_ref(h, attention_mask, layer_params, num_heads, eps):
    saved = []
    for p in layer_params:
        saved.append(h[:, 0])
        h = bert_layer_ref(h, attention_mask, p, num_heads, eps)
    return h, saved


# --------------------------------------------------------------------------- #
# deterministic parameter init (non-zero biases so bias wiring is exercised)
# --------------------------------------------------------------------------- #
def init_layer_params(key, hidden, intermediate):
    ks = jax.random.split(key, 16)
    lin = lambda k, fi, fo: jax.random.normal(k, (fi, fo), jnp.float32) * 0.02
    vec = lambda k, n, s=0.02: jax.random.normal(k, (1, n), jnp.float32) * s
    return {
        "wq": lin(ks[0], hidden, hidden), "bq": vec(ks[1], hidden),
        "wk": lin(ks[2], hidden, hidden), "bk": vec(ks[3], hidden),
        "wv": lin(ks[4], hidden, hidden), "bv": vec(ks[5], hidden),
        "wo": lin(ks[6], hidden, hidden), "bo": vec(ks[7], hidden),
        "g1": 1.0 + vec(ks[8], hidden, 0.1), "be1": vec(ks[9], hidden, 0.1),
        "wi": lin(ks[10], hidden, intermediate), "bi": vec(ks[11], intermediate),
        "w2": lin(ks[12], intermediate, hidden), "b2": vec(ks[13], hidden),
        "g2": 1.0 + vec(ks[14], hidden, 0.1), "be2": vec(ks[15], hidden, 0.1),
    }


if __name__ == "__main__":
    root = jax.random.PRNGKey(0)
    k_h, k_m, *k_layers = jax.random.split(root, 2 + NUM_LAYERS)

    hidden_states = jax.random.normal(k_h, (BATCH, SEQ, HIDDEN), jnp.float32)

    # additive attention mask in HF convention: 0 keep, -10000 masked, (B,1,1,S)
    keep = (jax.random.uniform(k_m, (BATCH, SEQ)) > 0.2).astype(jnp.float32)
    attention_mask = ((1.0 - keep) * -10000.0)[:, None, None, :]

    layer_params = [init_layer_params(k, HIDDEN, INTERMEDIATE) for k in k_layers]

    out, saved = bert_encoder_pallas(hidden_states, attention_mask, layer_params,
                                     num_heads=NUM_HEADS, eps=LN_EPS,
                                     save_hidden=True)
    out = jax.block_until_ready(out)

    ref_out, ref_saved = bert_encoder_ref(hidden_states, attention_mask,
                                          layer_params, NUM_HEADS, LN_EPS)

    assert out.shape == (BATCH, SEQ, HIDDEN)
    # tolerance covers TPU default-precision differences between the XLA
    # reference matmuls and the in-kernel MXU matmuls
    assert jnp.allclose(out, ref_out, atol=2e-3, rtol=2e-3), (
        float(jnp.max(jnp.abs(out - ref_out))))
    assert len(saved) == NUM_LAYERS
    for s_got, s_ref in zip(saved, ref_saved):
        assert jnp.allclose(s_got, s_ref, atol=2e-3, rtol=2e-3), (
            float(jnp.max(jnp.abs(s_got - s_ref))))

    # TODO(synk): dropout layers are treated as identity (eval mode); training-mode
    # stochastic dropout would use pltpu.prng_seed/prng_random_bits.
    print("KERNEL_OK")
</pallas_src>

<mosaic_0001>
module attributes {stable_mosaic.version = 11 : i64} {
  func.func @bert_encoder_kernel(%arg0: i32, %arg1: i32, %arg2: memref<1x8x32xf32, #tpu.memory_space<vmem>>, %arg3: memref<1x1x8xf32, #tpu.memory_space<vmem>>, %arg4: memref<1x32x96xf32, #tpu.memory_space<vmem>>, %arg5: memref<1x4x8x32xf32, #tpu.memory_space<vmem>>, %arg6: memref<1x32x64xf32, #tpu.memory_space<vmem>>, %arg7: memref<1x64x32xf32, #tpu.memory_space<vmem>>, %arg8: memref<1x8x96xf32, #tpu.memory_space<vmem>>, %arg9: memref<1x8x32xf32, #tpu.memory_space<vmem>>, %arg10: memref<1x1x1x32xf32, #tpu.memory_space<vmem>>) attributes {dimension_semantics = [#tpu.dimension_semantics<parallel>, #tpu.dimension_semantics<arbitrary>], iteration_bounds = array<i64: 2, 2>, scalar_prefetch = 0 : i64, scratch_operands = 0 : i64, tpu.core_type = #tpu.core_type<tc>, window_params = [{pipeline_mode = #tpu.pipeline_mode<synchronous>, transform_indices = @transform_0, window_bounds = array<i64: 1, 8, 32>}, {pipeline_mode = #tpu.pipeline_mode<synchronous>, transform_indices = @transform_1, window_bounds = array<i64: 1, 1, 8>}, {transform_indices = @transform_2, window_bounds = array<i64: 1, 32, 96>}, {transform_indices = @transform_3, window_bounds = array<i64: 1, 4, 8, 32>}, {transform_indices = @transform_4, window_bounds = array<i64: 1, 32, 64>}, {transform_indices = @transform_5, window_bounds = array<i64: 1, 64, 32>}, {transform_indices = @transform_6, window_bounds = array<i64: 1, 8, 96>}, {transform_indices = @transform_7, window_bounds = array<i64: 1, 8, 32>}, {transform_indices = @transform_8, window_bounds = array<i64: 1, 1, 1, 32>}]} {
    %c0_i32 = arith.constant 0 : i32
    %0 = arith.cmpi eq, %arg1, %c0_i32 : i32
    %1 = arith.extui %0 : i1 to i32
    %c0_i32_0 = arith.constant 0 : i32
    %2 = arith.cmpi ne, %1, %c0_i32_0 : i32
    scf.if %2 {
      %c0_52 = arith.constant 0 : index
      %c0_53 = arith.constant 0 : index
      %c0_54 = arith.constant 0 : index
      %147 = vector.load %arg2[%c0_52, %c0_53, %c0_54] : memref<1x8x32xf32, #tpu.memory_space<vmem>>, vector<1x8x32xf32>
      %c0_55 = arith.constant 0 : index
      %c0_56 = arith.constant 0 : index
      %c0_57 = arith.constant 0 : index
      %148 = vector.load %arg9[%c0_55, %c0_56, %c0_57] : memref<1x8x32xf32, #tpu.memory_space<vmem>>, vector<1x8x32xf32>
      tpu.vector_store %arg9[%c0_55, %c0_56, %c0_57], %147 {strides = array<i32>} : memref<1x8x32xf32, #tpu.memory_space<vmem>>, vector<1x8x32xf32>,
    } else {
    }
    %c0 = arith.constant 0 : index
    %c0_1 = arith.constant 0 : index
    %c0_2 = arith.constant 0 : index
    %3 = vector.load %arg9[%c0, %c0_1, %c0_2] : memref<1x8x32xf32, #tpu.memory_space<vmem>>, vector<1x8x32xf32>
    %4 = vector.shape_cast %3 : vector<1x8x32xf32> to vector<8x32xf32>
    %5 = vector.extract_strided_slice %4 {offsets = [0, 0], sizes = [1, 32], strides = [1, 1]} : vector<8x32xf32> to vector<1x32xf32>
    %6 = vector.shape_cast %5 : vector<1x32xf32> to vector<1x1x1x32xf32>
    %c0_3 = arith.constant 0 : index
    %c0_4 = arith.constant 0 : index
    %c0_5 = arith.constant 0 : index
    %c0_6 = arith.constant 0 : index
    %7 = vector.load %arg10[%c0_3, %c0_4, %c0_5, %c0_6] : memref<1x1x1x32xf32, #tpu.memory_space<vmem>>, vector<1x1x1x32xf32>
    tpu.vector_store %arg10[%c0_3, %c0_4, %c0_5, %c0_6], %6 {strides = array<i32>} : memref<1x1x1x32xf32, #tpu.memory_space<vmem>>, vector<1x1x1x32xf32>,
    %c0_7 = arith.constant 0 : index
    %c0_8 = arith.constant 0 : index
    %c0_9 = arith.constant 0 : index
    %8 = vector.load %arg3[%c0_7, %c0_8, %c0_9] : memref<1x1x8xf32, #tpu.memory_space<vmem>>, vector<1x1x8xf32>
    %9 = vector.shape_cast %8 : vector<1x1x8xf32> to vector<1x8xf32>
    %c0_10 = arith.constant 0 : index
    %c0_11 = arith.constant 0 : index
    %c0_12 = arith.constant 0 : index
    %10 = vector.load %arg4[%c0_10, %c0_11, %c0_12] : memref<1x32x96xf32, #tpu.memory_space<vmem>>, vector<1x32x96xf32>
    %11 = vector.shape_cast %10 : vector<1x32x96xf32> to vector<32x96xf32>
    %c0_13 = arith.constant 0 : index
    %c0_14 = arith.constant 0 : index
    %c0_15 = arith.constant 0 : index
    %c0_16 = arith.constant 0 : index
    %12 = vector.load %arg5[%c0_13, %c0_14, %c0_15, %c0_16] : memref<1x4x8x32xf32, #tpu.memory_space<vmem>>, vector<1x4x8x32xf32>
    %13 = vector.shape_cast %12 : vector<1x4x8x32xf32> to vector<4x8x32xf32>
    %c0_17 = arith.constant 0 : index
    %c0_18 = arith.constant 0 : index
    %c0_19 = arith.constant 0 : index
    %14 = vector.load %arg6[%c0_17, %c0_18, %c0_19] : memref<1x32x64xf32, #tpu.memory_space<vmem>>, vector<1x32x64xf32>
    %15 = vector.shape_cast %14 : vector<1x32x64xf32> to vector<32x64xf32>
    %c0_20 = arith.constant 0 : index
    %c0_21 = arith.constant 0 : index
    %c0_22 = arith.constant 0 : index
    %16 = vector.load %arg7[%c0_20, %c0_21, %c0_22] : memref<1x64x32xf32, #tpu.memory_space<vmem>>, vector<1x64x32xf32>
    %17 = vector.shape_cast %16 : vector<1x64x32xf32> to vector<64x32xf32>
    %c0_23 = arith.constant 0 : index
    %c0_24 = arith.constant 0 : index
    %c0_25 = arith.constant 0 : index
    %18 = vector.load %arg8[%c0_23, %c0_24, %c0_25] : memref<1x8x96xf32, #tpu.memory_space<vmem>>, vector<1x8x96xf32>
    %19 = vector.shape_cast %18 : vector<1x8x96xf32> to vector<8x96xf32>
    %20 = vector.extract_strided_slice %19 {offsets = [0, 0], sizes = [1, 96], strides = [1, 1]} : vector<8x96xf32> to vector<1x96xf32>
    %21 = vector.extract_strided_slice %19 {offsets = [1, 0], sizes = [1, 32], strides = [1, 1]} : vector<8x96xf32> to vector<1x32xf32>
    %22 = vector.extract_strided_slice %19 {offsets = [2, 0], sizes = [1, 32], strides = [1, 1]} : vector<8x96xf32> to vector<1x32xf32>
    %23 = vector.extract_strided_slice %19 {offsets = [3, 0], sizes = [1, 32], strides = [1, 1]} : vector<8x96xf32> to vector<1x32xf32>
    %24 = vector.extract_strided_slice %19 {offsets = [4, 0], sizes = [1, 64], strides = [1, 1]} : vector<8x96xf32> to vector<1x64xf32>
    %25 = vector.extract_strided_slice %19 {offsets = [5, 0], sizes = [1, 32], strides = [1, 1]} : vector<8x96xf32> to vector<1x32xf32>
    %26 = vector.extract_strided_slice %19 {offsets = [6, 0], sizes = [1, 32], strides = [1, 1]} : vector<8x96xf32> to vector<1x32xf32>
    %27 = vector.extract_strided_slice %19 {offsets = [7, 0], sizes = [1, 32], strides = [1, 1]} : vector<8x96xf32> to vector<1x32xf32>
    %cst = arith.constant dense<0.000000e+00> : vector<8x96xf32>
    %28 = tpu.matmul %4, %11, %cst {dimension_numbers = #tpu.dot_dimension_numbers<[1], [0], [0], [1], [0, 0, 1, 1], [], []>} : vector<8x32xf32>, vector<32x96xf32>, vector<8x96xf32> -> vector<8x96xf32>
    %29 = vector.broadcast %20 : vector<1x96xf32> to vector<8x96xf32>
    %30 = arith.addf %28, %29 : vector<8x96xf32>
    %31 = vector.extract_strided_slice %30 {offsets = [0, 0], sizes = [8, 8], strides = [1, 1]} : vector<8x96xf32> to vector<8x8xf32>
    %32 = vector.extract_strided_slice %30 {offsets = [0, 8], sizes = [8, 8], strides = [1, 1]} : vector<8x96xf32> to vector<8x8xf32>
    %33 = vector.extract_strided_slice %30 {offsets = [0, 16], sizes = [8, 8], strides = [1, 1]} : vector<8x96xf32> to vector<8x8xf32>
    %34 = vector.extract_strided_slice %30 {offsets = [0, 24], sizes = [8, 8], strides = [1, 1]} : vector<8x96xf32> to vector<8x8xf32>
    %35 = vector.shape_cast %31 : vector<8x8xf32> to vector<1x8x8xf32>
    %36 = vector.shape_cast %32 : vector<8x8xf32> to vector<1x8x8xf32>
    %37 = vector.shape_cast %33 : vector<8x8xf32> to vector<1x8x8xf32>
    %38 = vector.shape_cast %34 : vector<8x8xf32> to vector<1x8x8xf32>
    %39 = tpu.concatenate %35, %36, %37, %38 in 0 : vector<1x8x8xf32>, vector<1x8x8xf32>, vector<1x8x8xf32>, vector<1x8x8xf32> -> vector<4x8x8xf32>
    %40 = vector.extract_strided_slice %30 {offsets = [0, 32], sizes = [8, 8], strides = [1, 1]} : vector<8x96xf32> to vector<8x8xf32>
    %41 = vector.extract_strided_slice %30 {offsets = [0, 40], sizes = [8, 8], strides = [1, 1]} : vector<8x96xf32> to vector<8x8xf32>
    %42 = vector.extract_strided_slice %30 {offsets = [0, 48], sizes = [8, 8], strides = [1, 1]} : vector<8x96xf32> to vector<8x8xf32>
    %43 = vector.extract_strided_slice %30 {offsets = [0, 56], sizes = [8, 8], strides = [1, 1]} : vector<8x96xf32> to vector<8x8xf32>
    %44 = vector.shape_cast %40 : vector<8x8xf32> to vector<1x8x8xf32>
    %45 = vector.shape_cast %41 : vector<8x8xf32> to vector<1x8x8xf32>
    %46 = vector.shape_cast %42 : vector<8x8xf32> to vector<1x8x8xf32>
    %47 = vector.shape_cast %43 : vector<8x8xf32> to vector<1x8x8xf32>
    %48 = tpu.concatenate %44, %45, %46, %47 in 0 : vector<1x8x8xf32>, vector<1x8x8xf32>, vector<1x8x8xf32>, vector<1x8x8xf32> -> vector<4x8x8xf32>
    %49 = vector.extract_strided_slice %30 {offsets = [0, 64], sizes = [8, 8], strides = [1, 1]} : vector<8x96xf32> to vector<8x8xf32>
    %50 = vector.extract_strided_slice %30 {offsets = [0, 72], sizes = [8, 8], strides = [1, 1]} : vector<8x96xf32> to vector<8x8xf32>
    %51 = vector.extract_strided_slice %30 {offsets = [0, 80], sizes = [8, 8], strides = [1, 1]} : vector<8x96xf32> to vector<8x8xf32>
    %52 = vector.extract_strided_slice %30 {offsets = [0, 88], sizes = [8, 8], strides = [1, 1]} : vector<8x96xf32> to vector<8x8xf32>
    %53 = vector.shape_cast %49 : vector<8x8xf32> to vector<1x8x8xf32>
    %54 = vector.shape_cast %50 : vector<8x8xf32> to vector<1x8x8xf32>
    %55 = vector.shape_cast %51 : vector<8x8xf32> to vector<1x8x8xf32>
    %56 = vector.shape_cast %52 : vector<8x8xf32> to vector<1x8x8xf32>
    %57 = tpu.concatenate %53, %54, %55, %56 in 0 : vector<1x8x8xf32>, vector<1x8x8xf32>, vector<1x8x8xf32>, vector<1x8x8xf32> -> vector<4x8x8xf32>
    "tpu.trace_start"() <{level = 10 : i32, message = "hqd,hkd->hqk"}> : () -> ()
    %cst_26 = arith.constant dense<0.000000e+00> : vector<4x8x8xf32>
    %58 = tpu.matmul %39, %48, %cst_26 {dimension_numbers = #tpu.dot_dimension_numbers<[2], [2], [1], [1], [0, 0, 0, 1, 1, 1], [0], [0]>} : vector<4x8x8xf32>, vector<4x8x8xf32>, vector<4x8x8xf32> -> vector<4x8x8xf32>
    "tpu.trace_stop"() : () -> ()
    %cst_27 = arith.constant 0.353553385 : f32
    %59 = vector.broadcast %cst_27 : f32 to vector<4x8x8xf32>
    %60 = arith.mulf %58, %59 : vector<4x8x8xf32>
    %61 = vector.shape_cast %9 : vector<1x8xf32> to vector<1x1x8xf32>
    %62 = vector.broadcast %61 : vector<1x1x8xf32> to vector<4x8x8xf32>
    %63 = arith.addf %60, %62 : vector<4x8x8xf32>
    %cst_28 = arith.constant dense<0xFF800000> : vector<4x8xf32>
    %64 = vector.multi_reduction <maximumf>, %63, %cst_28 [2] : vector<4x8x8xf32> to vector<4x8xf32>
    %65 = vector.shape_cast %64 : vector<4x8xf32> to vector<4x8x1xf32>
    %66 = vector.broadcast %65 : vector<4x8x1xf32> to vector<4x8x8xf32>
    %67 = arith.subf %63, %66 : vector<4x8x8xf32>
    %68 = math.exp %67 : vector<4x8x8xf32>
    %cst_29 = arith.constant dense<0.000000e+00> : vector<4x8xf32>
    %69 = vector.multi_reduction <add>, %68, %cst_29 [2] : vector<4x8x8xf32> to vector<4x8xf32>
    %70 = vector.shape_cast %69 : vector<4x8xf32> to vector<4x8x1xf32>
    %71 = vector.broadcast %70 : vector<4x8x1xf32> to vector<4x8x8xf32>
    %72 = arith.divf %68, %71 : vector<4x8x8xf32>
    "tpu.trace_start"() <{level = 10 : i32, message = "hqk,hkd->hqd"}> : () -> ()
    %cst_30 = arith.constant dense<0.000000e+00> : vector<4x8x8xf32>
    %73 = tpu.matmul %72, %57, %cst_30 {dimension_numbers = #tpu.dot_dimension_numbers<[2], [1], [1], [2], [0, 0, 0, 1, 1, 2], [0], [0]>} : vector<4x8x8xf32>, vector<4x8x8xf32>, vector<4x8x8xf32> -> vector<4x8x8xf32>
    "tpu.trace_stop"() : () -> ()
    "tpu.trace_start"() <{level = 10 : i32, message = "hqd,hde->hqe"}> : () -> ()
    %cst_31 = arith.constant dense<0.000000e+00> : vector<4x8x32xf32>
    %74 = tpu.matmul %73, %13, %cst_31 {dimension_numbers = #tpu.dot_dimension_numbers<[2], [1], [1], [2], [0, 0, 0, 1, 1, 2], [0], [0]>} : vector<4x8x8xf32>, vector<4x8x32xf32>, vector<4x8x32xf32> -> vector<4x8x32xf32>
    "tpu.trace_stop"() : () -> ()
    %cst_32 = arith.constant dense<0.000000e+00> : vector<8x32xf32>
    %75 = vector.multi_reduction <add>, %74, %cst_32 [0] : vector<4x8x32xf32> to vector<8x32xf32>
    %76 = vector.broadcast %21 : vector<1x32xf32> to vector<8x32xf32>
    %77 = arith.addf %75, %76 : vector<8x32xf32>
    %78 = arith.addf %77, %4 : vector<8x32xf32>
    %cst_33 = arith.constant dense<0.000000e+00> : vector<8xf32>
    %79 = vector.multi_reduction <add>, %78, %cst_33 [1] : vector<8x32xf32> to vector<8xf32>
    %80 = vector.shape_cast %79 : vector<8xf32> to vector<8x1xf32>
    %cst_34 = arith.constant 3.200000e+01 : f32
    %81 = vector.broadcast %cst_34 : f32 to vector<8x1xf32>
    %82 = arith.divf %80, %81 : vector<8x1xf32>
    %83 = vector.broadcast %82 : vector<8x1xf32> to vector<8x32xf32>
    %84 = arith.subf %78, %83 : vector<8x32xf32>
    %85 = arith.mulf %84, %84 : vector<8x32xf32>
    %cst_35 = arith.constant dense<0.000000e+00> : vector<8xf32>
    %86 = vector.multi_reduction <add>, %85, %cst_35 [1] : vector<8x32xf32> to vector<8xf32>
    %87 = vector.shape_cast %86 : vector<8xf32> to vector<8x1xf32>
    %cst_36 = arith.constant 3.200000e+01 : f32
    %88 = vector.broadcast %cst_36 : f32 to vector<8x1xf32>
    %89 = arith.divf %87, %88 : vector<8x1xf32>
    %90 = vector.broadcast %82 : vector<8x1xf32> to vector<8x32xf32>
    %91 = arith.subf %78, %90 : vector<8x32xf32>
    %cst_37 = arith.constant 9.99999996E-13 : f32
    %92 = vector.broadcast %cst_37 : f32 to vector<8x1xf32>
    %93 = arith.addf %89, %92 : vector<8x1xf32>
    %94 = math.rsqrt %93 : vector<8x1xf32>
    %95 = vector.broadcast %94 : vector<8x1xf32> to vector<8x32xf32>
    %96 = arith.mulf %91, %95 : vector<8x32xf32>
    %97 = vector.broadcast %22 : vector<1x32xf32> to vector<8x32xf32>
    %98 = arith.mulf %96, %97 : vector<8x32xf32>
    %99 = vector.broadcast %23 : vector<1x32xf32> to vector<8x32xf32>
    %100 = arith.addf %98, %99 : vector<8x32xf32>
    %cst_38 = arith.constant dense<0.000000e+00> : vector<8x64xf32>
    %101 = tpu.matmul %100, %15, %cst_38 {dimension_numbers = #tpu.dot_dimension_numbers<[1], [0], [0], [1], [0, 0, 1, 1], [], []>} : vector<8x32xf32>, vector<32x64xf32>, vector<8x64xf32> -> vector<8x64xf32>
    %102 = vector.broadcast %24 : vector<1x64xf32> to vector<8x64xf32>
    %103 = arith.addf %101, %102 : vector<8x64xf32>
    %cst_39 = arith.constant 5.000000e-01 : f32
    %104 = vector.broadcast %cst_39 : f32 to vector<8x64xf32>
    %105 = arith.mulf %104, %103 : vector<8x64xf32>
    %cst_40 = arith.constant 0.636619746 : f32
    %106 = math.sqrt %cst_40 : f32
    %cst_41 = arith.constant 4.471500e-02 : f32
    %107 = vector.broadcast %cst_41 : f32 to vector<8x64xf32>
    %108 = arith.mulf %107, %103 : vector<8x64xf32>
    %109 = arith.mulf %108, %103 : vector<8x64xf32>
    %110 = arith.mulf %109, %103 : vector<8x64xf32>
    %111 = arith.addf %103, %110 : vector<8x64xf32>
    %112 = vector.broadcast %106 : f32 to vector<8x64xf32>
    %113 = arith.mulf %112, %111 : vector<8x64xf32>
    %114 = math.tanh %113 : vector<8x64xf32>
    %cst_42 = arith.constant 1.000000e+00 : f32
    %115 = vector.broadcast %cst_42 : f32 to vector<8x64xf32>
    %116 = arith.addf %115, %114 : vector<8x64xf32>
    %117 = arith.mulf %105, %116 : vector<8x64xf32>
    %cst_43 = arith.constant dense<0.000000e+00> : vector<8x32xf32>
    %118 = tpu.matmul %117, %17, %cst_43 {dimension_numbers = #tpu.dot_dimension_numbers<[1], [0], [0], [1], [0, 0, 1, 1], [], []>} : vector<8x64xf32>, vector<64x32xf32>, vector<8x32xf32> -> vector<8x32xf32>
    %119 = vector.broadcast %25 : vector<1x32xf32> to vector<8x32xf32>
    %120 = arith.addf %118, %119 : vector<8x32xf32>
    %121 = arith.addf %120, %100 : vector<8x32xf32>
    %cst_44 = arith.constant dense<0.000000e+00> : vector<8xf32>
    %122 = vector.multi_reduction <add>, %121, %cst_44 [1] : vector<8x32xf32> to vector<8xf32>
    %123 = vector.shape_cast %122 : vector<8xf32> to vector<8x1xf32>
    %cst_45 = arith.constant 3.200000e+01 : f32
    %124 = vector.broadcast %cst_45 : f32 to vector<8x1xf32>
    %125 = arith.divf %123, %124 : vector<8x1xf32>
    %126 = vector.broadcast %125 : vector<8x1xf32> to vector<8x32xf32>
    %127 = arith.subf %121, %126 : vector<8x32xf32>
    %128 = arith.mulf %127, %127 : vector<8x32xf32>
    %cst_46 = arith.constant dense<0.000000e+00> : vector<8xf32>
    %129 = vector.multi_reduction <add>, %128, %cst_46 [1] : vector<8x32xf32> to vector<8xf32>
    %130 = vector.shape_cast %129 : vector<8xf32> to vector<8x1xf32>
    %cst_47 = arith.constant 3.200000e+01 : f32
    %131 = vector.broadcast %cst_47 : f32 to vector<8x1xf32>
    %132 = arith.divf %130, %131 : vector<8x1xf32>
    %133 = vector.broadcast %125 : vector<8x1xf32> to vector<8x32xf32>
    %134 = arith.subf %121, %133 : vector<8x32xf32>
    %cst_48 = arith.constant 9.99999996E-13 : f32
    %135 = vector.broadcast %cst_48 : f32 to vector<8x1xf32>
    %136 = arith.addf %132, %135 : vector<8x1xf32>
    %137 = math.rsqrt %136 : vector<8x1xf32>
    %138 = vector.broadcast %137 : vector<8x1xf32> to vector<8x32xf32>
    %139 = arith.mulf %134, %138 : vector<8x32xf32>
    %140 = vector.broadcast %26 : vector<1x32xf32> to vector<8x32xf32>
    %141 = arith.mulf %139, %140 : vector<8x32xf32>
    %142 = vector.broadcast %27 : vector<1x32xf32> to vector<8x32xf32>
    %143 = arith.addf %141, %142 : vector<8x32xf32>
    %c0_49 = arith.constant 0 : index
    %c0_50 = arith.constant 0 : index
    %c0_51 = arith.constant 0 : index
    %144 = vector.load %arg9[%c0_49, %c0_50, %c0_51] : memref<1x8x32xf32, #tpu.memory_space<vmem>>, vector<1x8x32xf32>
    %145 = vector.shape_cast %144 : vector<1x8x32xf32> to vector<8x32xf32>
    %146 = vector.shape_cast %143 : vector<8x32xf32> to vector<1x8x32xf32>
    tpu.vector_store %arg9[%c0_49, %c0_50, %c0_51], %146 {strides = array<i32>} : memref<1x8x32xf32, #tpu.memory_space<vmem>>, vector<1x8x32xf32>,
    return
  }
  func.func @transform_0(%arg0: i32, %arg1: i32) -> (i32, i32, i32) {
    %c0_i32 = arith.constant 0 : i32
    %c0_i32_0 = arith.constant 0 : i32
    %c0_i32_1 = arith.constant 0 : i32
    return %arg0, %c0_i32, %c0_i32_0 : i32, i32, i32
  }
  func.func @transform_1(%arg0: i32, %arg1: i32) -> (i32, i32, i32) {
    %c0_i32 = arith.constant 0 : i32
    %c0_i32_0 = arith.constant 0 : i32
    %c0_i32_1 = arith.constant 0 : i32
    return %arg0, %c0_i32, %c0_i32_0 : i32, i32, i32
  }
  func.func @transform_2(%arg0: i32, %arg1: i32) -> (i32, i32, i32) {
    %c0_i32 = arith.constant 0 : i32
    %c0_i32_0 = arith.constant 0 : i32
    %c0_i32_1 = arith.constant 0 : i32
    return %arg1, %c0_i32, %c0_i32_0 : i32, i32, i32
  }
  func.func @transform_3(%arg0: i32, %arg1: i32) -> (i32, i32, i32, i32) {
    %c0_i32 = arith.constant 0 : i32
    %c0_i32_0 = arith.constant 0 : i32
    %c0_i32_1 = arith.constant 0 : i32
    %c0_i32_2 = arith.constant 0 : i32
    return %arg1, %c0_i32, %c0_i32_0, %c0_i32_1 : i32, i32, i32, i32
  }
  func.func @transform_4(%arg0: i32, %arg1: i32) -> (i32, i32, i32) {
    %c0_i32 = arith.constant 0 : i32
    %c0_i32_0 = arith.constant 0 : i32
    %c0_i32_1 = arith.constant 0 : i32
    return %arg1, %c0_i32, %c0_i32_0 : i32, i32, i32
  }
  func.func @transform_5(%arg0: i32, %arg1: i32) -> (i32, i32, i32) {
    %c0_i32 = arith.constant 0 : i32
    %c0_i32_0 = arith.constant 0 : i32
    %c0_i32_1 = arith.constant 0 : i32
    return %arg1, %c0_i32, %c0_i32_0 : i32, i32, i32
  }
  func.func @transform_6(%arg0: i32, %arg1: i32) -> (i32, i32, i32) {
    %c0_i32 = arith.constant 0 : i32
    %c0_i32_0 = arith.constant 0 : i32
    %c0_i32_1 = arith.constant 0 : i32
    return %arg1, %c0_i32, %c0_i32_0 : i32, i32, i32
  }
  func.func @transform_7(%arg0: i32, %arg1: i32) -> (i32, i32, i32) {
    %c0_i32 = arith.constant 0 : i32
    %c0_i32_0 = arith.constant 0 : i32
    %c0_i32_1 = arith.constant 0 : i32
    return %arg0, %c0_i32, %c0_i32_0 : i32, i32, i32
  }
  func.func @transform_8(%arg0: i32, %arg1: i32) -> (i32, i32, i32, i32) {
    %c0_i32 = arith.constant 0 : i32
    %c0_i32_0 = arith.constant 0 : i32
    %c0_i32_1 = arith.constant 0 : i32
    return %arg0, %arg1, %c0_i32, %c0_i32_0 : i32, i32, i32, i32
  }
}

</mosaic_0001>

<llo_original>
// kernel: tpu_custom_call.1
$region0: #{tpu_custom_call.1}
  #allocation0 [shape = 'u32[]', space=smem, size = 0x4, offset = 0x4, fixed_abs, tag = 'smem constant byte address 0x4 - core index']
  #allocation1 [shape = 'u32[144,128]{1,0:T(1,128)}', space=vmem, size = 0x12000, scoped, tag = 'internal scratch']
  %s0 = inlined_call_operand.hbm [shape: f32[2,8,32], index: 0, kind: input, shape index: {}]
  %s1 = inlined_call_operand.vmem [shape: f32[2,1,8], index: 1, kind: input, shape index: {}]
  %s2 = inlined_call_operand.vmem [shape: f32[2,32,96], index: 2, kind: input, shape index: {}]
  %s3 = inlined_call_operand.vmem [shape: f32[2,4,8,32], index: 3, kind: input, shape index: {}]
  %s4 = inlined_call_operand.vmem [shape: f32[2,32,64], index: 4, kind: input, shape index: {}]
  %s5 = inlined_call_operand.vmem [shape: f32[2,64,32], index: 5, kind: input, shape index: {}]
  %s6 = inlined_call_operand.vmem [shape: f32[2,8,96], index: 6, kind: input, shape index: {}]
  %s7 = inlined_call_operand.hbm [shape: f32[2,8,32], index: 7, kind: output, shape index: {0}]
  %s8 = inlined_call_operand.hbm [shape: f32[2,2,1,32], index: 8, kind: output, shape index: {1}]
  %9 = xla_tuple %s7, %s8
  %s10 = sld [smem:[#allocation0]]
  $region77: #{tpu_custom_call.1} parent=0
    _
  %s12 = ssub.s32 1, %s10
  %s13 = scalar_select 0, %s12, %s10
  $region1: #{tpu_custom_call.1} parent=0
    #allocation2 [shape = 'u8[4096]{0}', space=vmem, size = 0x1000, scoped, tag = 'input window, operand 0, single buffered']
    #allocation3 [shape = 's32[2]{0}', space=sflag, size = 0x8, scoped, tag = 'scoped memory for tpu_custom_call.1']
    #allocation4 [shape = 's32[2]{0}', space=sflag, size = 0x8, scoped, tag = 'scoped memory for tpu_custom_call.1']
    #allocation5 [shape = 'u8[8192]{0}', space=vmem, size = 0x2000, scoped, tag = 'output window, operand 0']
    #allocation6 [shape = 'u8[1024]{0}', space=vmem, size = 0x400, scoped, tag = 'output window, operand 1']
    #allocation7 [shape = 's32[2]{0}', space=sflag, size = 0x8, scoped, tag = 'scoped memory for tpu_custom_call.1']
    %14 = vsyncpa [#allocation3], 0
    %15 = vsyncpa [#allocation4], 0
    %s16 = scalar_lea.sflag [#allocation4], 1
    %17 = vsyncpa %s16, 0
    %18 = vsyncpa [#allocation7], 0
    %s19 = scalar_lea.sflag [#allocation7], 1
    %20 = vsyncpa %s19, 0
    loop: start=0, step=1, limit=6
    $region2: #{tpu_custom_call.1} parent=1 // loop_pre_header
      _
    $region3: #{tpu_custom_call.1} parent=1 // loop_header
      %s22 = sphi 0, %s26
      %p23 = scmp.ge.s32.totalorder %s22, 6
      %s29 = sphi 0, %s41
      %s30 = sphi 0, %s37
      %s31 = sphi 0, %s29
      %s32 = sphi 0, %s30
      %s33 = sphi 0, %s31
      %s34 = sphi 0, %s32
      %s44 = sphi 0, %s46
      %s47 = sphi 0, %s44
      %s48 = sphi 0, %s47
      %s64 = sphi 0, %s48
      %s70 = sphi 0, %s72
      %s73 = sphi 0, %s70
      %s74 = sphi 0, %s73
      %s90 = sphi 0, %s74
      %s96 = sphi 0, %s98
      %s99 = sphi 0, %s96
      %s100 = sphi 0, %s99
      %s116 = sphi 0, %s100
      %s122 = sphi 0, %s124
      %s125 = sphi 0, %s122
      %s126 = sphi 0, %s125
      %s142 = sphi 0, %s126
      %s148 = sphi 0, %s150
      %s151 = sphi 0, %s148
      %s152 = sphi 0, %s151
      %s168 = sphi 0, %s152
      %s174 = sphi 0, %s176
      %s177 = sphi 0, %s174
      %s178 = sphi 0, %s177
      %s194 = sphi 0, %s178
      %s200 = sphi 0, %s202
      %s203 = sphi 0, %s200
      %s204 = sphi 0, %s203
      %s220 = sphi 0, %s204
      %s226 = sphi 0, %s228
      %s229 = sphi 0, %s226
      %s230 = sphi 0, %s229
      %s246 = sphi 0, %s230
      %s254 = sphi 0, %s256
      %s257 = sphi 0, %s254
      %s258 = sphi 0, %s257
      %s274 = sphi 0, %s258
    $region4: #{tpu_custom_call.1} parent=1 // loop_header_branch
      %25 = sbr.rel (%p23) target = $region8
    $region5: #{tpu_custom_call.1} parent=1 // loop_body
      %s27 = ssub.s32 %s22, 1
      %s28 = ssub.s32 %s22, 2
      %s35 = sadd.s32 1, %s30
      %p36 = scmp.ge.s32.totalorder %s35, 2
      %s37 = scalar_select %p36, 0, %s35
      %s38 = sadd.s32 1, %s29
      %s39 = scalar_select %p36, %s38, %s29
      %p40 = scmp.ge.s32.totalorder %s39, 2
      %s41 = scalar_select %p40, 0, %s39
      %s42 = ssub.s32 %s29, %s41
      %p43 = scmp.eq.s32.totalorder %s42, 0
      %s45 = sadd.s32 %s44, 1
      %s46 = scalar_select %p43, %s44, %s45
      %p49 = pneg %p43
      %p50 = scmp.eq.s32.totalorder %s22, 3
      %p51 = por %p49, %p50
      %p52 = scmp.ne.s32.totalorder %s44, %s47
      %p53 = scmp.eq.s32.totalorder %s22, 0
      %p54 = por %p52, %p53
      %p55 = scmp.ne.s32.totalorder %s44, %s47
      %p56 = scmp.eq.s32.totalorder %s27, 3
      %p57 = por %p55, %p56
      %p58 = scmp.ne.s32.totalorder %s47, %s48
      %p59 = scmp.eq.s32.totalorder %s27, 0
      %p60 = por %p58, %p59
      %p61 = scmp.ne.s32.totalorder %s47, %s48
      %p62 = scmp.eq.s32.totalorder %s28, 3
      %p63 = por %p61, %p62
      %p65 = scmp.ne.s32.totalorder %s48, %s64
      %p66 = scmp.eq.s32.totalorder %s28, 0
      %p67 = por %p65, %p66
      %s68 = ssub.s32 %s29, %s41
      %p69 = scmp.eq.s32.totalorder %s68, 0
      %s71 = sadd.s32 %s70, 1
      %s72 = scalar_select %p69, %s70, %s71
      %p75 = pneg %p69
      %p76 = scmp.eq.s32.totalorder %s22, 3
      %p77 = por %p75, %p76
      %p78 = scmp.ne.s32.totalorder %s70, %s73
      %p79 = scmp.eq.s32.totalorder %s22, 0
      %p80 = por %p78, %p79
      %p81 = scmp.ne.s32.totalorder %s70, %s73
      %p82 = scmp.eq.s32.totalorder %s27, 3
      %p83 = por %p81, %p82
      %p84 = scmp.ne.s32.totalorder %s73, %s74
      %p85 = scmp.eq.s32.totalorder %s27, 0
      %p86 = por %p84, %p85
      %p87 = scmp.ne.s32.totalorder %s73, %s74
      %p88 = scmp.eq.s32.totalorder %s28, 3
      %p89 = por %p87, %p88
      %p91 = scmp.ne.s32.totalorder %s74, %s90
      %p92 = scmp.eq.s32.totalorder %s28, 0
      %p93 = por %p91, %p92
      %s94 = ssub.s32 %s30, %s37
      %p95 = scmp.eq.s32.totalorder %s94, 0
      %s97 = sadd.s32 %s96, 1
      %s98 = scalar_select %p95, %s96, %s97
      %p101 = pneg %p95
      %p102 = scmp.eq.s32.totalorder %s22, 3
      %p103 = por %p101, %p102
      %p104 = scmp.ne.s32.totalorder %s96, %s99
      %p105 = scmp.eq.s32.totalorder %s22, 0
      %p106 = por %p104, %p105
      %p107 = scmp.ne.s32.totalorder %s96, %s99
      %p108 = scmp.eq.s32.totalorder %s27, 3
      %p109 = por %p107, %p108
      %p110 = scmp.ne.s32.totalorder %s99, %s100
      %p111 = scmp.eq.s32.totalorder %s27, 0
      %p112 = por %p110, %p111
      %p113 = scmp.ne.s32.totalorder %s99, %s100
      %p114 = scmp.eq.s32.totalorder %s28, 3
      %p115 = por %p113, %p114
      %p117 = scmp.ne.s32.totalorder %s100, %s116
      %p118 = scmp.eq.s32.totalorder %s28, 0
      %p119 = por %p117, %p118
      %s120 = ssub.s32 %s30, %s37
      %p121 = scmp.eq.s32.totalorder %s120, 0
      %s123 = sadd.s32 %s122, 1
      %s124 = scalar_select %p121, %s122, %s123
      %p127 = pneg %p121
      %p128 = scmp.eq.s32.totalorder %s22, 3
      %p129 = por %p127, %p128
      %p130 = scmp.ne.s32.totalorder %s122, %s125
      %p131 = scmp.eq.s32.totalorder %s22, 0
      %p132 = por %p130, %p131
      %p133 = scmp.ne.s32.totalorder %s122, %s125
      %p134 = scmp.eq.s32.totalorder %s27, 3
      %p135 = por %p133, %p134
      %p136 = scmp.ne.s32.totalorder %s125, %s126
      %p137 = scmp.eq.s32.totalorder %s27, 0
      %p138 = por %p136, %p137
      %p139 = scmp.ne.s32.totalorder %s125, %s126
      %p140 = scmp.eq.s32.totalorder %s28, 3
      %p141 = por %p139, %p140
      %p143 = scmp.ne.s32.totalorder %s126, %s142
      %p144 = scmp.eq.s32.totalorder %s28, 0
      %p145 = por %p143, %p144
      %s146 = ssub.s32 %s30, %s37
      %p147 = scmp.eq.s32.totalorder %s146, 0
      %s149 = sadd.s32 %s148, 1
      %s150 = scalar_select %p147, %s148, %s149
      %p153 = pneg %p147
      %p154 = scmp.eq.s32.totalorder %s22, 3
      %p155 = por %p153, %p154
      %p156 = scmp.ne.s32.totalorder %s148, %s151
      %p157 = scmp.eq.s32.totalorder %s22, 0
      %p158 = por %p156, %p157
      %p159 = scmp.ne.s32.totalorder %s148, %s151
      %p160 = scmp.eq.s32.totalorder %s27, 3
      %p161 = por %p159, %p160
      %p162 = scmp.ne.s32.totalorder %s151, %s152
      %p163 = scmp.eq.s32.totalorder %s27, 0
      %p164 = por %p162, %p163
      %p165 = scmp.ne.s32.totalorder %s151, %s152
      %p166 = scmp.eq.s32.totalorder %s28, 3
      %p167 = por %p165, %p166
      %p169 = scmp.ne.s32.totalorder %s152, %s168
      %p170 = scmp.eq.s32.totalorder %s28, 0
      %p171 = por %p169, %p170
      %s172 = ssub.s32 %s30, %s37
      %p173 = scmp.eq.s32.totalorder %s172, 0
      %s175 = sadd.s32 %s174, 1
      %s176 = scalar_select %p173, %s174, %s175
      %p179 = pneg %p173
      %p180 = scmp.eq.s32.totalorder %s22, 3
      %p181 = por %p179, %p180
      %p182 = scmp.ne.s32.totalorder %s174, %s177
      %p183 = scmp.eq.s32.totalorder %s22, 0
      %p184 = por %p182, %p183
      %p185 = scmp.ne.s32.totalorder %s174, %s177
      %p186 = scmp.eq.s32.totalorder %s27, 3
      %p187 = por %p185, %p186
      %p188 = scmp.ne.s32.totalorder %s177, %s178
      %p189 = scmp.eq.s32.totalorder %s27, 0
      %p190 = por %p188, %p189
      %p191 = scmp.ne.s32.totalorder %s177, %s178
      %p192 = scmp.eq.s32.totalorder %s28, 3
      %p193 = por %p191, %p192
      %p195 = scmp.ne.s32.totalorder %s178, %s194
      %p196 = scmp.eq.s32.totalorder %s28, 0
      %p197 = por %p195, %p196
      %s198 = ssub.s32 %s30, %s37
      %p199 = scmp.eq.s32.totalorder %s198, 0
      %s201 = sadd.s32 %s200, 1
      %s202 = scalar_select %p199, %s200, %s201
      %p205 = pneg %p199
      %p206 = scmp.eq.s32.totalorder %s22, 3
      %p207 = por %p205, %p206
      %p208 = scmp.ne.s32.totalorder %s200, %s203
      %p209 = scmp.eq.s32.totalorder %s22, 0
      %p210 = por %p208, %p209
      %p211 = scmp.ne.s32.totalorder %s200, %s203
      %p212 = scmp.eq.s32.totalorder %s27, 3
      %p213 = por %p211, %p212
      %p214 = scmp.ne.s32.totalorder %s203, %s204
      %p215 = scmp.eq.s32.totalorder %s27, 0
      %p216 = por %p214, %p215
      %p217 = scmp.ne.s32.totalorder %s203, %s204
      %p218 = scmp.eq.s32.totalorder %s28, 3
      %p219 = por %p217, %p218
      %p221 = scmp.ne.s32.totalorder %s204, %s220
      %p222 = scmp.eq.s32.totalorder %s28, 0
      %p223 = por %p221, %p222
      %s224 = ssub.s32 %s29, %s41
      %p225 = scmp.eq.s32.totalorder %s224, 0
      %s227 = sadd.s32 %s226, 1
      %s228 = scalar_select %p225, %s226, %s227
      %p231 = pneg %p225
      %p232 = scmp.eq.s32.totalorder %s22, 3
      %p233 = por %p231, %p232
      %p234 = scmp.ne.s32.totalorder %s226, %s229
      %p235 = scmp.eq.s32.totalorder %s22, 0
      %p236 = por %p234, %p235
      %p237 = scmp.ne.s32.totalorder %s226, %s229
      %p238 = scmp.eq.s32.totalorder %s27, 3
      %p239 = por %p237, %p238
      %p240 = scmp.ne.s32.totalorder %s229, %s230
      %p241 = scmp.eq.s32.totalorder %s27, 0
      %p242 = por %p240, %p241
      %p243 = scmp.ne.s32.totalorder %s229, %s230
      %p244 = scmp.eq.s32.totalorder %s28, 3
      %p245 = por %p243, %p244
      %p247 = scmp.ne.s32.totalorder %s230, %s246
      %p248 = scmp.eq.s32.totalorder %s28, 0
      %p249 = por %p247, %p248
      %s250 = ssub.s32 %s29, %s41
      %s251 = ssub.s32 %s30, %s37
      %s252 = sor.u32 %s250, %s251
      %p253 = scmp.eq.s32.totalorder %s252, 0
      %s255 = sadd.s32 %s254, 1
      %s256 = scalar_select %p253, %s254, %s255
      %p259 = pneg %p253
      %p260 = scmp.eq.s32.totalorder %s22, 3
      %p261 = por %p259, %p260
      %p262 = scmp.ne.s32.totalorder %s254, %s257
      %p263 = scmp.eq.s32.totalorder %s22, 0
      %p264 = por %p262, %p263
      %p265 = scmp.ne.s32.totalorder %s254, %s257
      %p266 = scmp.eq.s32.totalorder %s27, 3
      %p267 = por %p265, %p266
      %p268 = scmp.ne.s32.totalorder %s257, %s258
      %p269 = scmp.eq.s32.totalorder %s27, 0
      %p270 = por %p268, %p269
      %p271 = scmp.ne.s32.totalorder %s257, %s258
      %p272 = scmp.eq.s32.totalorder %s28, 3
      %p273 = por %p271, %p272
      %p275 = scmp.ne.s32.totalorder %s258, %s274
      %p276 = scmp.eq.s32.totalorder %s28, 0
      %p277 = por %p275, %p276
      %p278 = scmp.le.s32.totalorder 1, %s22
      %p279 = scmp.lt.s32.totalorder %s22, 5
      %p280 = pnand %p278, %p279
      %p281 = pneg %p280
      // Predicated region
      $region9: #{tpu_custom_call.1} parent=5 // pred_check
        _
      $region10: #{tpu_custom_call.1} parent=5 // pred_check_branch
        %283 = sbr.rel (%p280) target = $region12
      $region11: #{tpu_custom_call.1} parent=5 // pred_region
        %s284 = ssub.s32 %s22, 1
        // Predicated region
        $region13: #{tpu_custom_call.1} parent=11 // pred_check
          %p285 = pneg %p60
        $region14: #{tpu_custom_call.1} parent=11 // pred_check_branch
          %287 = sbr.rel (%p285) target = $region16
        $region15: #{tpu_custom_call.1} parent=11 // pred_region
          %s289 = ssub.s32 128, 128
          %290 = vsyncadd [#allocation3], %s289
          %s291 = smul.addr %s31, 128
          %s292 = scalar_lea.hbm %s0, %s291
          %s294 = sshll.u32 [#allocation2], 4
          %s295 = int_to_ptr.vmem [resolvable:$true] %s294
          %297 = dma.hbm_to_vmem [thread:$0]  %s292, 128, %s295, [#allocation3]
        $region16: #{tpu_custom_call.1} parent=11 // pred_fallthru
          _
        // Predicated region
        $region17: #{tpu_custom_call.1} parent=11 // pred_check
          %p298 = pneg %p86
        $region18: #{tpu_custom_call.1} parent=11 // pred_check_branch
          %300 = sbr.rel (%p298) target = $region20
        $region19: #{tpu_custom_call.1} parent=11 // pred_region
          %p301 = scmp.lt.s32.totalorder %s31, 1
          %s302 = scalar_select %p301, %s31, 1
          %s303 = scalar_lea.vmem %s1, %s302
        $region20: #{tpu_custom_call.1} parent=11 // pred_fallthru
          _
      $region12: #{tpu_custom_call.1} parent=5 // pred_fallthru
        _
      %p304 = scmp.lt.s32.totalorder %s22, 4
      // Predicated region
      $region21: #{tpu_custom_call.1} parent=5 // pred_check
        %p305 = pneg %p304
      $region22: #{tpu_custom_call.1} parent=5 // pred_check_branch
        %307 = sbr.rel (%p305) target = $region24
      $region23: #{tpu_custom_call.1} parent=5 // pred_region
        // Predicated region
        $region25: #{tpu_custom_call.1} parent=23 // pred_check
          %p308 = pneg %p106
        $region26: #{tpu_custom_call.1} parent=23 // pred_check_branch
          %310 = sbr.rel (%p308) target = $region28
        $region27: #{tpu_custom_call.1} parent=23 // pred_region
          %p311 = scmp.lt.s32.totalorder %s30, 1
          %s312 = scalar_select %p311, %s30, 1
          %s313 = smul.addr %s312, 4
          %s314 = smul.addr %s313, 8
          %s315 = scalar_lea.vmem %s2, %s314
        $region28: #{tpu_custom_call.1} parent=23 // pred_fallthru
          _
        // Predicated region
        $region29: #{tpu_custom_call.1} parent=23 // pred_check
          %p316 = pneg %p132
        $region30: #{tpu_custom_call.1} parent=23 // pred_check_branch
          %318 = sbr.rel (%p316) target = $region32
        $region31: #{tpu_custom_call.1} parent=23 // pred_region
          %p319 = scmp.lt.s32.totalorder %s30, 1
          %s320 = scalar_select %p319, %s30, 1
          %s321 = smul.addr %s320, 4
          %s322 = smul.addr %s321, 8
          %s323 = scalar_lea.vmem %s3, %s322
        $region32: #{tpu_custom_call.1} parent=23 // pred_fallthru
          _
        // Predicated region
        $region33: #{tpu_custom_call.1} parent=23 // pred_check
          %p324 = pneg %p158
        $region34: #{tpu_custom_call.1} parent=23 // pred_check_branch
          %326 = sbr.rel (%p324) target = $region36
        $region35: #{tpu_custom_call.1} parent=23 // pred_region
          %p327 = scmp.lt.s32.totalorder %s30, 1
          %s328 = scalar_select %p327, %s30, 1
          %s329 = smul.addr %s328, 4
          %s330 = smul.addr %s329, 8
          %s331 = scalar_lea.vmem %s4, %s330
        $region36: #{tpu_custom_call.1} parent=23 // pred_fallthru
          _
        // Predicated region
        $region37: #{tpu_custom_call.1} parent=23 // pred_check
          %p332 = pneg %p184
        $region38: #{tpu_custom_call.1} parent=23 // pred_check_branch
          %334 = sbr.rel (%p332) target = $region40
        $region39: #{tpu_custom_call.1} parent=23 // pred_region
          %p335 = scmp.lt.s32.totalorder %s30, 1
          %s336 = scalar_select %p335, %s30, 1
          %s337 = smul.addr %s336, 8
          %s338 = smul.addr %s337, 8
          %s339 = scalar_lea.vmem %s5, %s338
        $region40: #{tpu_custom_call.1} parent=23 // pred_fallthru
          _
        // Predicated region
        $region41: #{tpu_custom_call.1} parent=23 // pred_check
          %p340 = pneg %p210
        $region42: #{tpu_custom_call.1} parent=23 // pred_check_branch
          %342 = sbr.rel (%p340) target = $region44
        $region43: #{tpu_custom_call.1} parent=23 // pred_region
          %p343 = scmp.lt.s32.totalorder %s30, 1
          %s344 = scalar_select %p343, %s30, 1
          %s345 = smul.addr %s344, 8
          %s346 = scalar_lea.vmem %s6, %s345
        $region44: #{tpu_custom_call.1} parent=23 // pred_fallthru
          _
      $region24: #{tpu_custom_call.1} parent=5 // pred_fallthru
        _
      %p347 = scmp.le.s32.totalorder 1, %s22
      %p348 = scmp.lt.s32.totalorder %s22, 5
      %p349 = pnand %p347, %p348
      %p350 = pneg %p349
      // Predicated region
      $region45: #{tpu_custom_call.1} parent=5 // pred_check
        _
      $region46: #{tpu_custom_call.1} parent=5 // pred_check_branch
        %352 = sbr.rel (%p349) target = $region48
      $region47: #{tpu_custom_call.1} parent=5 // pred_region
        %s353 = ssub.s32 %s22, 1
        // Predicated region
        $region49: #{tpu_custom_call.1} parent=47 // pred_check
          %p354 = pneg %p60
        $region50: #{tpu_custom_call.1} parent=47 // pred_check_branch
          %356 = sbr.rel (%p354) target = $region52
        $region51: #{tpu_custom_call.1} parent=47 // pred_region
          %357 = dma.done [#allocation3], 128
        $region52: #{tpu_custom_call.1} parent=47 // pred_fallthru
          _
        %p358 = pneg %p60
        %p359 = pneg %p57
        %p360 = scmp.lt.s32.totalorder %s31, 1
        %s361 = scalar_select %p360, %s31, 1
        %s362 = scalar_lea.vmem %s1, %s361
        %p363 = pneg %p86
        %p364 = pneg %p83
        %p365 = scmp.lt.s32.totalorder %s32, 1
        %s366 = scalar_select %p365, %s32, 1
        %s367 = smul.addr %s366, 4
        %s368 = smul.addr %s367, 8
        %s369 = scalar_lea.vmem %s2, %s368
        %p370 = pneg %p112
        %p371 = pneg %p109
        %p372 = scmp.lt.s32.totalorder %s32, 1
        %s373 = scalar_select %p372, %s32, 1
        %s374 = smul.addr %s373, 4
        %s375 = smul.addr %s374, 8
        %s376 = scalar_lea.vmem %s3, %s375
        %p377 = pneg %p138
        %p378 = pneg %p135
        %p379 = scmp.lt.s32.totalorder %s32, 1
        %s380 = scalar_select %p379, %s32, 1
        %s381 = smul.addr %s380, 4
        %s382 = smul.addr %s381, 8
        %s383 = scalar_lea.vmem %s4, %s382
        %p384 = pneg %p164
        %p385 = pneg %p161
        %p386 = scmp.lt.s32.totalorder %s32, 1
        %s387 = scalar_select %p386, %s32, 1
        %s388 = smul.addr %s387, 8
        %s389 = smul.addr %s388, 8
        %s390 = scalar_lea.vmem %s5, %s389
        %p391 = pneg %p190
        %p392 = pneg %p187
        %p393 = scmp.lt.s32.totalorder %s32, 1
        %s394 = scalar_select %p393, %s32, 1
        %s395 = smul.addr %s394, 8
        %s396 = scalar_lea.vmem %s6, %s395
        %p397 = pneg %p216
        %p398 = pneg %p213
        %p399 = pneg %p242
        %p400 = pneg %p239
        %s401 = sand.u32 %s229, 1
        %s402 = scalar_lea.sflag [#allocation4], %s401
        %s403 = sand.u32 %s229, 1
        %s404 = smul.addr %s403, 8
        %s405 = scalar_lea.vmem [#allocation5], %s404
        %p406 = pneg %p270
        %p407 = pneg %p267
        %s408 = sand.u32 %s257, 1
        %s409 = scalar_lea.sflag [#allocation7], %s408
        %s410 = sand.u32 %s257, 1
        %s411 = scalar_lea.vmem [#allocation6], %s410
        %p412 = scmp.lt.s32.totalorder %s31, 1
        %s413 = scalar_select %p412, %s31, 1
        %s414 = scalar_lea.vmem %s1, %s413
        %p415 = scmp.lt.s32.totalorder %s32, 1
        %s416 = scalar_select %p415, %s32, 1
        %s417 = smul.addr %s416, 4
        %s418 = smul.addr %s417, 8
        %s419 = scalar_lea.vmem %s2, %s418
        %p420 = scmp.lt.s32.totalorder %s32, 1
        %s421 = scalar_select %p420, %s32, 1
        %s422 = smul.addr %s421, 4
        %s423 = smul.addr %s422, 8
        %s424 = scalar_lea.vmem %s3, %s423
        %p425 = scmp.lt.s32.totalorder %s32, 1
        %s426 = scalar_select %p425, %s32, 1
        %s427 = smul.addr %s426, 4
        %s428 = smul.addr %s427, 8
        %s429 = scalar_lea.vmem %s4, %s428
        %p430 = scmp.lt.s32.totalorder %s32, 1
        %s431 = scalar_select %p430, %s32, 1
        %s432 = smul.addr %s431, 8
        %s433 = smul.addr %s432, 8
        %s434 = scalar_lea.vmem %s5, %s433
        %p435 = scmp.lt.s32.totalorder %s32, 1
        %s436 = scalar_select %p435, %s32, 1
        %s437 = smul.addr %s436, 8
        %s438 = scalar_lea.vmem %s6, %s437
        %p439 = scmp.eq.s32.totalorder %s32, 0
        // Predicated region
        $region53: #{tpu_custom_call.1} parent=47 // pred_check
          %p440 = pneg %p439
        $region54: #{tpu_custom_call.1} parent=47 // pred_check_branch
          %442 = sbr.rel (%p440) target = $region56
        $region55: #{tpu_custom_call.1} parent=47 // pred_region
          %v443 = vld [vmem:[#allocation2] sm:$0xff]
          %vm444 = vcmask 261120
          %445 = vst.msk [vmem:[%s405] sm:$0xff] %vm444, %v443
        $region56: #{tpu_custom_call.1} parent=47 // pred_fallthru
          _
        %v446 = vld [vmem:[%s405] sm:$0xff]
        %vm447 = vcmask 253952
        %448 = vst.msk [vmem:[%s411] sm:$0x1] %vm447, %v446
        %v449 = vld [vmem:[%s414] sm:$0x1]
        %v450 = vld [vmem:[%s419] sm:$0xff]
        %v451 = vld [vmem:[%s419 + $0x8] sm:$0xff]
        %v452 = vld [vmem:[%s419 + $0x10] sm:$0xff]
        %v453 = vld [vmem:[%s419 + $0x18] sm:$0xff]
        %v454 = vld [vmem:[%s424] sm:$0xff]
        %v455 = vld [vmem:[%s424 + $0x8] sm:$0xff]
        %v456 = vld [vmem:[%s424 + $0x10] sm:$0xff]
        %v457 = vld [vmem:[%s424 + $0x18] sm:$0xff]
        %v458 = vld [vmem:[%s429] sm:$0xff]
        %v459 = vld [vmem:[%s429 + $0x8] sm:$0xff]
        %v460 = vld [vmem:[%s429 + $0x10] sm:$0xff]
        %v461 = vld [vmem:[%s429 + $0x18] sm:$0xff]
        %v462 = vld [vmem:[%s434] sm:$0xff]
        %v463 = vld [vmem:[%s434 + $0x8] sm:$0xff]
        %v464 = vld [vmem:[%s434 + $0x10] sm:$0xff]
        %v465 = vld [vmem:[%s434 + $0x18] sm:$0xff]
        %v466 = vld [vmem:[%s434 + $0x20] sm:$0xff]
        %v467 = vld [vmem:[%s434 + $0x28] sm:$0xff]
        %v468 = vld [vmem:[%s434 + $0x30] sm:$0xff]
        %v469 = vld [vmem:[%s434 + $0x38] sm:$0xff]
        %v470 = vld [vmem:[%s438] sm:$0xff]
        %v471 = vlaneseq
        %v472 = vshrl.u32 %v471, 7
        %v473 = vsub.s32 0, %v472
        %v474 = vrot.slane %v470, %v473
        %vm475 = vcmask 261120
        %v477 = vsel %vm475, %v446, 0
        %479 = vmatprep.subr.mxu0 0.0
        %480 = vmatpush1.msra.mxu0 %v450
        %481 = vmatprep.subr.mxu0 0.0
        %482 = vmatpush1.msra.mxu0 %v451
        %483 = vmatprep.subr.mxu0 0.0
        %484 = vmatpush1.msra.mxu0 %v452
        %485 = vmatprep.subr.mxu0 0.0
        %486 = vmatpush1.msra.mxu0 %v453
        %487 = vmatprep.subr.mxu0 0.0
        %488 = vmatpush1.msra.mxu0 0.0
        %489 = vmatprep.subr.mxu0 0.0
        %490 = vmatpush1.msra.mxu0 0.0
        %491 = vmatprep.subr.mxu0 0.0
        %492 = vmatpush1.msra.mxu0 0.0
        %493 = vmatprep.subr.mxu0 0.0
        %494 = vmatpush1.msra.mxu0 0.0
        %495 = vmatprep.subr.mxu0 0.0
        %496 = vmatpush1.msra.mxu0 0.0
        %497 = vmatprep.subr.mxu0 0.0
        %498 = vmatpush1.msra.mxu0 0.0
        %499 = vmatprep.subr.mxu0 0.0
        %500 = vmatpush1.msra.mxu0 0.0
        %501 = vmatprep.subr.mxu0 0.0
        %502 = vmatpush1.msra.mxu0 0.0
        %503 = vmatprep.subr.mxu0 0.0
        %504 = vmatpush1.msra.mxu0 0.0
        %505 = vmatprep.subr.mxu0 0.0
        %506 = vmatpush1.msra.mxu0 0.0
        %507 = vmatprep.subr.mxu0 0.0
        %508 = vmatpush1.msra.mxu0 0.0
        %509 = vmatprep.subr.mxu0 0.0
        %510 = vmatpush1.msra.mxu0 0.0
        %511 = vmatprep.subr.mxu0 0.0
        %512 = vmatpush1.msra.mxu0 0.0
        %513 = vmatprep.subr.mxu0 0.0
        %514 = vmatpush1.msra.mxu0 0.0
        %515 = vmatprep.subr.mxu0 0.0
        %516 = vmatpush1.msra.mxu0 0.0
        %517 = vmatprep.subr.mxu0 0.0
        %518 = vmatpush1.msra.mxu0 0.0
        %519 = vmatprep.subr.mxu0 0.0
        %520 = vmatpush1.msra.mxu0 0.0
        %521 = vmatprep.subr.mxu0 0.0
        %522 = vmatpush1.msra.mxu0 0.0
        %523 = vmatprep.subr.mxu0 0.0
        %524 = vmatpush1.msra.mxu0 0.0
        %525 = vmatprep.subr.mxu0 0.0
        %526 = vmatpush1.msra.mxu0 0.0
        %527 = vmatprep.subr.mxu0 0.0
        %528 = vmatpush1.msra.mxu0 0.0
        %529 = vmatprep.subr.mxu0 0.0
        %530 = vmatpush1.msra.mxu0 0.0
        %531 = vmatprep.subr.mxu0 0.0
        %532 = vmatpush1.msra.mxu0 0.0
        %533 = vmatprep.subr.mxu0 0.0
        %534 = vmatpush1.msra.mxu0 0.0
        %535 = vmatprep.subr.mxu0 0.0
        %536 = vmatpush1.msra.mxu0 0.0
        %537 = vmatprep.subr.mxu0 0.0
        %538 = vmatpush1.msra.mxu0 0.0
        %539 = vmatprep.subr.mxu0 0.0
        %540 = vmatpush1.msra.mxu0 0.0
        %541 = vmatprep.subr.mxu0 0.0
        %542 = vmatpush1.msra.mxu0 0.0
        %543 = vmatprep.mubr.f32.mxu0 0.0
        %544 = vmatmul.mubr.f32.gmra.mrb[0].mxu0 %v477
        %v545 = vpop.f32.mrb[0].mxu0
        %v546 = vadd.f32 %v474, %v545
        %v547 = vpop.f32.mrb[0].mxu0
        %548 = vdwg.mxu0
        %550 = vrot.lane.b32.xlu0 %v546, 120
        %v551 = vpop.permute.xlu0 %550
        %552 = vrot.lane.b32.xlu0 %v546, 112
        %v553 = vpop.permute.xlu0 %552
        %554 = vrot.lane.b32.xlu0 %v546, 104
        %v555 = vpop.permute.xlu0 %554
        %556 = vrot.lane.b32.xlu0 %v546, 96
        %v557 = vpop.permute.xlu0 %556
        %vm558 = vcmask 64512
        %v559 = vsel %vm558, %v546, 0
        %v561 = vsel %vm558, %v557, 0
        %563 = vmatprep.subr.mxu0 0.0
        %564 = vmatpush1.xpose.msra.mxu0 %v561
        %565 = vmatprep.subr.mxu0 0.0
        %566 = vmatpush1.xpose.msra.mxu0 0.0
        %567 = vmatprep.subr.mxu0 0.0
        %568 = vmatpush1.xpose.msra.mxu0 0.0
        %569 = vmatprep.subr.mxu0 0.0
        %570 = vmatpush1.xpose.msra.mxu0 0.0
        %571 = vmatprep.subr.mxu0 0.0
        %572 = vmatpush1.xpose.msra.mxu0 0.0
        %573 = vmatprep.subr.mxu0 0.0
        %574 = vmatpush1.xpose.msra.mxu0 0.0
        %575 = vmatprep.subr.mxu0 0.0
        %576 = vmatpush1.xpose.msra.mxu0 0.0
        %577 = vmatprep.subr.mxu0 0.0
        %578 = vmatpush1.xpose.msra.mxu0 0.0
        %579 = vmatprep.subr.mxu0 0.0
        %580 = vmatpush1.xpose.msra.mxu0 0.0
        %581 = vmatprep.subr.mxu0 0.0
        %582 = vmatpush1.xpose.msra.mxu0 0.0
        %583 = vmatprep.subr.mxu0 0.0
        %584 = vmatpush1.xpose.msra.mxu0 0.0
        %585 = vmatprep.subr.mxu0 0.0
        %586 = vmatpush1.xpose.msra.mxu0 0.0
        %587 = vmatprep.subr.mxu0 0.0
        %588 = vmatpush1.xpose.msra.mxu0 0.0
        %589 = vmatprep.subr.mxu0 0.0
        %590 = vmatpush1.xpose.msra.mxu0 0.0
        %591 = vmatprep.subr.mxu0 0.0
        %592 = vmatpush1.xpose.msra.mxu0 0.0
        %593 = vmatprep.subr.mxu0 0.0
        %594 = vmatpush1.xpose.msra.mxu0 0.0
        %595 = vmatprep.subr.mxu0 0.0
        %596 = vmatpush1.xpose.msra.mxu0 0.0
        %597 = vmatprep.subr.mxu0 0.0
        %598 = vmatpush1.xpose.msra.mxu0 0.0
        %599 = vmatprep.subr.mxu0 0.0
        %600 = vmatpush1.xpose.msra.mxu0 0.0
        %601 = vmatprep.subr.mxu0 0.0
        %602 = vmatpush1.xpose.msra.mxu0 0.0
        %603 = vmatprep.subr.mxu0 0.0
        %604 = vmatpush1.xpose.msra.mxu0 0.0
        %605 = vmatprep.subr.mxu0 0.0
        %606 = vmatpush1.xpose.msra.mxu0 0.0
        %607 = vmatprep.subr.mxu0 0.0
        %608 = vmatpush1.xpose.msra.mxu0 0.0
        %609 = vmatprep.subr.mxu0 0.0
        %610 = vmatpush1.xpose.msra.mxu0 0.0
        %611 = vmatprep.subr.mxu0 0.0
        %612 = vmatpush1.xpose.msra.mxu0 0.0
        %613 = vmatprep.subr.mxu0 0.0
        %614 = vmatpush1.xpose.msra.mxu0 0.0
        %615 = vmatprep.subr.mxu0 0.0
        %616 = vmatpush1.xpose.msra.mxu0 0.0
        %617 = vmatprep.subr.mxu0 0.0
        %618 = vmatpush1.xpose.msra.mxu0 0.0
        %619 = vmatprep.subr.mxu0 0.0
        %620 = vmatpush1.xpose.msra.mxu0 0.0
        %621 = vmatprep.subr.mxu0 0.0
        %622 = vmatpush1.xpose.msra.mxu0 0.0
        %623 = vmatprep.subr.mxu0 0.0
        %624 = vmatpush1.xpose.msra.mxu0 0.0
        %625 = vmatprep.subr.mxu0 0.0
        %626 = vmatpush1.xpose.msra.mxu0 0.0
        %627 = vmatprep.mubr.f32.mxu0 0.0
        %628 = vmatmul.mubr.f32.gmra.mrb[0].mxu0 %v559
        %v629 = vpop.f32.mrb[0].mxu0
        %v630 = vadd.f32 0.0, %v629
        %v631 = vpop.f32.mrb[0].mxu0
        %632 = vdwg.mxu0
        %633 = vrot.lane.b32.xlu0 %v551, 96
        %v634 = vpop.permute.xlu0 %633
        %v635 = vsel %vm558, %v551, 0
        %v637 = vsel %vm558, %v634, 0
        %639 = vmatprep.subr.mxu0 0.0
        %640 = vmatpush1.xpose.msra.mxu0 %v637
        %641 = vmatprep.subr.mxu0 0.0
        %642 = vmatpush1.xpose.msra.mxu0 0.0
        %643 = vmatprep.subr.mxu0 0.0
        %644 = vmatpush1.xpose.msra.mxu0 0.0
        %645 = vmatprep.subr.mxu0 0.0
        %646 = vmatpush1.xpose.msra.mxu0 0.0
        %647 = vmatprep.subr.mxu0 0.0
        %648 = vmatpush1.xpose.msra.mxu0 0.0
        %649 = vmatprep.subr.mxu0 0.0
        %650 = vmatpush1.xpose.msra.mxu0 0.0
        %651 = vmatprep.subr.mxu0 0.0
        %652 = vmatpush1.xpose.msra.mxu0 0.0
        %653 = vmatprep.subr.mxu0 0.0
        %654 = vmatpush1.xpose.msra.mxu0 0.0
        %655 = vmatprep.subr.mxu0 0.0
        %656 = vmatpush1.xpose.msra.mxu0 0.0
        %657 = vmatprep.subr.mxu0 0.0
        %658 = vmatpush1.xpose.msra.mxu0 0.0
        %659 = vmatprep.subr.mxu0 0.0
        %660 = vmatpush1.xpose.msra.mxu0 0.0
        %661 = vmatprep.subr.mxu0 0.0
        %662 = vmatpush1.xpose.msra.mxu0 0.0
        %663 = vmatprep.subr.mxu0 0.0
        %664 = vmatpush1.xpose.msra.mxu0 0.0
        %665 = vmatprep.subr.mxu0 0.0
        %666 = vmatpush1.xpose.msra.mxu0 0.0
        %667 = vmatprep.subr.mxu0 0.0
        %668 = vmatpush1.xpose.msra.mxu0 0.0
        %669 = vmatprep.subr.mxu0 0.0
        %670 = vmatpush1.xpose.msra.mxu0 0.0
        %671 = vmatprep.subr.mxu0 0.0
        %672 = vmatpush1.xpose.msra.mxu0 0.0
        %673 = vmatprep.subr.mxu0 0.0
        %674 = vmatpush1.xpose.msra.mxu0 0.0
        %675 = vmatprep.subr.mxu0 0.0
        %676 = vmatpush1.xpose.msra.mxu0 0.0
        %677 = vmatprep.subr.mxu0 0.0
        %678 = vmatpush1.xpose.msra.mxu0 0.0
        %679 = vmatprep.subr.mxu0 0.0
        %680 = vmatpush1.xpose.msra.mxu0 0.0
        %681 = vmatprep.subr.mxu0 0.0
        %682 = vmatpush1.xpose.msra.mxu0 0.0
        %683 = vmatprep.subr.mxu0 0.0
        %684 = vmatpush1.xpose.msra.mxu0 0.0
        %685 = vmatprep.subr.mxu0 0.0
        %686 = vmatpush1.xpose.msra.mxu0 0.0
        %687 = vmatprep.subr.mxu0 0.0
        %688 = vmatpush1.xpose.msra.mxu0 0.0
        %689 = vmatprep.subr.mxu0 0.0
        %690 = vmatpush1.xpose.msra.mxu0 0.0
        %691 = vmatprep.subr.mxu0 0.0
        %692 = vmatpush1.xpose.msra.mxu0 0.0
        %693 = vmatprep.subr.mxu0 0.0
        %694 = vmatpush1.xpose.msra.mxu0 0.0
        %695 = vmatprep.subr.mxu0 0.0
        %696 = vmatpush1.xpose.msra.mxu0 0.0
        %697 = vmatprep.subr.mxu0 0.0
        %698 = vmatpush1.xpose.msra.mxu0 0.0
        %699 = vmatprep.subr.mxu0 0.0
        %700 = vmatpush1.xpose.msra.mxu0 0.0
        %701 = vmatprep.subr.mxu0 0.0
        %702 = vmatpush1.xpose.msra.mxu0 0.0
        %703 = vmatprep.mubr.f32.mxu0 0.0
        %704 = vmatmul.mubr.f32.gmra.mrb[0].mxu0 %v635
        %v705 = vpop.f32.mrb[0].mxu0
        %v706 = vadd.f32 0.0, %v705
        %v707 = vpop.f32.mrb[0].mxu0
        %708 = vdwg.mxu0
        %709 = vrot.lane.b32.xlu0 %v553, 96
        %v710 = vpop.permute.xlu0 %709
        %v711 = vsel %vm558, %v553, 0
        %v713 = vsel %vm558, %v710, 0
        %715 = vmatprep.subr.mxu0 0.0
        %716 = vmatpush1.xpose.msra.mxu0 %v713
        %717 = vmatprep.subr.mxu0 0.0
        %718 = vmatpush1.xpose.msra.mxu0 0.0
        %719 = vmatprep.subr.mxu0 0.0
        %720 = vmatpush1.xpose.msra.mxu0 0.0
        %721 = vmatprep.subr.mxu0 0.0
        %722 = vmatpush1.xpose.msra.mxu0 0.0
        %723 = vmatprep.subr.mxu0 0.0
        %724 = vmatpush1.xpose.msra.mxu0 0.0
        %725 = vmatprep.subr.mxu0 0.0
        %726 = vmatpush1.xpose.msra.mxu0 0.0
        %727 = vmatprep.subr.mxu0 0.0
        %728 = vmatpush1.xpose.msra.mxu0 0.0
        %729 = vmatprep.subr.mxu0 0.0
        %730 = vmatpush1.xpose.msra.mxu0 0.0
        %731 = vmatprep.subr.mxu0 0.0
        %732 = vmatpush1.xpose.msra.mxu0 0.0
        %733 = vmatprep.subr.mxu0 0.0
        %734 = vmatpush1.xpose.msra.mxu0 0.0
        %735 = vmatprep.subr.mxu0 0.0
        %736 = vmatpush1.xpose.msra.mxu0 0.0
        %737 = vmatprep.subr.mxu0 0.0
        %738 = vmatpush1.xpose.msra.mxu0 0.0
        %739 = vmatprep.subr.mxu0 0.0
        %740 = vmatpush1.xpose.msra.mxu0 0.0
        %741 = vmatprep.subr.mxu0 0.0
        %742 = vmatpush1.xpose.msra.mxu0 0.0
        %743 = vmatprep.subr.mxu0 0.0
        %744 = vmatpush1.xpose.msra.mxu0 0.0
        %745 = vmatprep.subr.mxu0 0.0
        %746 = vmatpush1.xpose.msra.mxu0 0.0
        %747 = vmatprep.subr.mxu0 0.0
        %748 = vmatpush1.xpose.msra.mxu0 0.0
        %749 = vmatprep.subr.mxu0 0.0
        %750 = vmatpush1.xpose.msra.mxu0 0.0
        %751 = vmatprep.subr.mxu0 0.0
        %752 = vmatpush1.xpose.msra.mxu0 0.0
        %753 = vmatprep.subr.mxu0 0.0
        %754 = vmatpush1.xpose.msra.mxu0 0.0
        %755 = vmatprep.subr.mxu0 0.0
        %756 = vmatpush1.xpose.msra.mxu0 0.0
        %757 = vmatprep.subr.mxu0 0.0
        %758 = vmatpush1.xpose.msra.mxu0 0.0
        %759 = vmatprep.subr.mxu0 0.0
        %760 = vmatpush1.xpose.msra.mxu0 0.0
        %761 = vmatprep.subr.mxu0 0.0
        %762 = vmatpush1.xpose.msra.mxu0 0.0
        %763 = vmatprep.subr.mxu0 0.0
        %764 = vmatpush1.xpose.msra.mxu0 0.0
        %765 = vmatprep.subr.mxu0 0.0
        %766 = vmatpush1.xpose.msra.mxu0 0.0
        %767 = vmatprep.subr.mxu0 0.0
        %768 = vmatpush1.xpose.msra.mxu0 0.0
        %769 = vmatprep.subr.mxu0 0.0
        %770 = vmatpush1.xpose.msra.mxu0 0.0
        %771 = vmatprep.subr.mxu0 0.0
        %772 = vmatpush1.xpose.msra.mxu0 0.0
        %773 = vmatprep.subr.mxu0 0.0
        %774 = vmatpush1.xpose.msra.mxu0 0.0
        %775 = vmatprep.subr.mxu0 0.0
        %776 = vmatpush1.xpose.msra.mxu0 0.0
        %777 = vmatprep.subr.mxu0 0.0
        %778 = vmatpush1.xpose.msra.mxu0 0.0
        %779 = vmatprep.mubr.f32.mxu0 0.0
        %780 = vmatmul.mubr.f32.gmra.mrb[0].mxu0 %v711
        %v781 = vpop.f32.mrb[0].mxu0
        %v782 = vadd.f32 0.0, %v781
        %v783 = vpop.f32.mrb[0].mxu0
        %784 = vdwg.mxu0
        %785 = vrot.lane.b32.xlu0 %v555, 96
        %v786 = vpop.permute.xlu0 %785
        %v787 = vsel %vm558, %v555, 0
        %v789 = vsel %vm558, %v786, 0
        %791 = vmatprep.subr.mxu0 0.0
        %792 = vmatpush1.xpose.msra.mxu0 %v789
        %793 = vmatprep.subr.mxu0 0.0
        %794 = vmatpush1.xpose.msra.mxu0 0.0
        %795 = vmatprep.subr.mxu0 0.0
        %796 = vmatpush1.xpose.msra.mxu0 0.0
        %797 = vmatprep.subr.mxu0 0.0
        %798 = vmatpush1.xpose.msra.mxu0 0.0
        %799 = vmatprep.subr.mxu0 0.0
        %800 = vmatpush1.xpose.msra.mxu0 0.0
        %801 = vmatprep.subr.mxu0 0.0
        %802 = vmatpush1.xpose.msra.mxu0 0.0
        %803 = vmatprep.subr.mxu0 0.0
        %804 = vmatpush1.xpose.msra.mxu0 0.0
        %805 = vmatprep.subr.mxu0 0.0
        %806 = vmatpush1.xpose.msra.mxu0 0.0
        %807 = vmatprep.subr.mxu0 0.0
        %808 = vmatpush1.xpose.msra.mxu0 0.0
        %809 = vmatprep.subr.mxu0 0.0
        %810 = vmatpush1.xpose.msra.mxu0 0.0
        %811 = vmatprep.subr.mxu0 0.0
        %812 = vmatpush1.xpose.msra.mxu0 0.0
        %813 = vmatprep.subr.mxu0 0.0
        %814 = vmatpush1.xpose.msra.mxu0 0.0
        %815 = vmatprep.subr.mxu0 0.0
        %816 = vmatpush1.xpose.msra.mxu0 0.0
        %817 = vmatprep.subr.mxu0 0.0
        %818 = vmatpush1.xpose.msra.mxu0 0.0
        %819 = vmatprep.subr.mxu0 0.0
        %820 = vmatpush1.xpose.msra.mxu0 0.0
        %821 = vmatprep.subr.mxu0 0.0
        %822 = vmatpush1.xpose.msra.mxu0 0.0
        %823 = vmatprep.subr.mxu0 0.0
        %824 = vmatpush1.xpose.msra.mxu0 0.0
        %825 = vmatprep.subr.mxu0 0.0
        %826 = vmatpush1.xpose.msra.mxu0 0.0
        %827 = vmatprep.subr.mxu0 0.0
        %828 = vmatpush1.xpose.msra.mxu0 0.0
        %829 = vmatprep.subr.mxu0 0.0
        %830 = vmatpush1.xpose.msra.mxu0 0.0
        %831 = vmatprep.subr.mxu0 0.0
        %832 = vmatpush1.xpose.msra.mxu0 0.0
        %833 = vmatprep.subr.mxu0 0.0
        %834 = vmatpush1.xpose.msra.mxu0 0.0
        %835 = vmatprep.subr.mxu0 0.0
        %836 = vmatpush1.xpose.msra.mxu0 0.0
        %837 = vmatprep.subr.mxu0 0.0
        %838 = vmatpush1.xpose.msra.mxu0 0.0
        %839 = vmatprep.subr.mxu0 0.0
        %840 = vmatpush1.xpose.msra.mxu0 0.0
        %841 = vmatprep.subr.mxu0 0.0
        %842 = vmatpush1.xpose.msra.mxu0 0.0
        %843 = vmatprep.subr.mxu0 0.0
        %844 = vmatpush1.xpose.msra.mxu0 0.0
        %845 = vmatprep.subr.mxu0 0.0
        %846 = vmatpush1.xpose.msra.mxu0 0.0
        %847 = vmatprep.subr.mxu0 0.0
        %848 = vmatpush1.xpose.msra.mxu0 0.0
        %849 = vmatprep.subr.mxu0 0.0
        %850 = vmatpush1.xpose.msra.mxu0 0.0
        %851 = vmatprep.subr.mxu0 0.0
        %852 = vmatpush1.xpose.msra.mxu0 0.0
        %853 = vmatprep.subr.mxu0 0.0
        %854 = vmatpush1.xpose.msra.mxu0 0.0
        %855 = vmatprep.mubr.f32.mxu0 0.0
        %856 = vmatmul.mubr.f32.gmra.mrb[0].mxu0 %v787
        %v857 = vpop.f32.mrb[0].mxu0
        %v858 = vadd.f32 0.0, %v857
        %v859 = vpop.f32.mrb[0].mxu0
        %860 = vdwg.mxu0
        %v861 = vmul.f32 %v630, 0.35355338
        %v862 = vmul.f32 %v706, 0.35355338
        %v863 = vmul.f32 %v782, 0.35355338
        %v864 = vmul.f32 %v858, 0.35355338
        %v866 = vlaneseq
        %v867 = vshrl.u32 %v866, 7
        %v868 = vsub.s32 0, %v867
        %v869 = vrot.slane %v449, %v868
        %v871 = vadd.f32 %v861, %v869
        %v872 = vadd.f32 %v862, %v869
        %v873 = vadd.f32 %v863, %v869
        %v874 = vadd.f32 %v864, %v869
        %v875 = vsel %vm558, %v871, -inf
        %876 = vmax.xlane.f32.xlu0 %v875
        %v877 = vpop.xlane.xlu0 %876
        %v878 = vsel %vm558, %v872, -inf
        %879 = vmax.xlane.f32.xlu0 %v878
        %v880 = vpop.xlane.xlu0 %879
        %v881 = vsel %vm558, %v873, -inf
        %882 = vmax.xlane.f32.xlu0 %v881
        %v883 = vpop.xlane.xlu0 %882
        %v884 = vsel %vm558, %v874, -inf
        %885 = vmax.xlane.f32.xlu0 %v884
        %v886 = vpop.xlane.xlu0 %885
        %v887 = vsub.f32 %v871, %v877
        %v888 = vsub.f32 %v872, %v880
        %v889 = vsub.f32 %v873, %v883
        %v890 = vsub.f32 %v874, %v886
        %v891 = vmul.f32 %v887, 1.442695
        %v892 = vpow.pop %v891
        %v893 = vmul.f32 %v888, 1.442695
        %v894 = vpow.pop %v893
        %v895 = vmul.f32 %v889, 1.442695
        %v896 = vpow.pop %v895
        %v897 = vmul.f32 %v890, 1.442695
        %v898 = vpow.pop %v897
        %v899 = vsel %vm558, %v892, 0.0
        %900 = vadd.xlane.f32.xlu0 %v899
        %v901 = vpop.xlane.xlu0 %900
        %v902 = vsel %vm558, %v894, 0.0
        %903 = vadd.xlane.f32.xlu0 %v902
        %v904 = vpop.xlane.xlu0 %903
        %v905 = vsel %vm558, %v896, 0.0
        %906 = vadd.xlane.f32.xlu0 %v905
        %v907 = vpop.xlane.xlu0 %906
        %v908 = vsel %vm558, %v898, 0.0
        %909 = vadd.xlane.f32.xlu0 %v908
        %v910 = vpop.xlane.xlu0 %909
        %v911 = vrcp.pop %v901
        %v912 = vmul.f32 %v892, %v911
        %v913 = vrcp.pop %v904
        %v914 = vmul.f32 %v894, %v913
        %v915 = vrcp.pop %v907
        %v916 = vmul.f32 %v896, %v915
        %v917 = vrcp.pop %v910
        %v918 = vmul.f32 %v898, %v917
        %919 = vrot.lane.b32.xlu0 %v546, 64
        %v920 = vpop.permute.xlu0 %919
        %v923 = vsel %vm558, %v912, 0
        %925 = vmatprep.subr.mxu0 0.0
        %926 = vmatpush1.msra.mxu0 %v920
        %927 = vmatprep.subr.mxu0 0.0
        %928 = vmatpush1.msra.mxu0 0.0
        %929 = vmatprep.subr.mxu0 0.0
        %930 = vmatpush1.msra.mxu0 0.0
        %931 = vmatprep.subr.mxu0 0.0
        %932 = vmatpush1.msra.mxu0 0.0
        %933 = vmatprep.subr.mxu0 0.0
        %934 = vmatpush1.msra.mxu0 0.0
        %935 = vmatprep.subr.mxu0 0.0
        %936 = vmatpush1.msra.mxu0 0.0
        %937 = vmatprep.subr.mxu0 0.0
        %938 = vmatpush1.msra.mxu0 0.0
        %939 = vmatprep.subr.mxu0 0.0
        %940 = vmatpush1.msra.mxu0 0.0
        %941 = vmatprep.subr.mxu0 0.0
        %942 = vmatpush1.msra.mxu0 0.0
        %943 = vmatprep.subr.mxu0 0.0
        %944 = vmatpush1.msra.mxu0 0.0
        %945 = vmatprep.subr.mxu0 0.0
        %946 = vmatpush1.msra.mxu0 0.0
        %947 = vmatprep.subr.mxu0 0.0
        %948 = vmatpush1.msra.mxu0 0.0
        %949 = vmatprep.subr.mxu0 0.0
        %950 = vmatpush1.msra.mxu0 0.0
        %951 = vmatprep.subr.mxu0 0.0
        %952 = vmatpush1.msra.mxu0 0.0
        %953 = vmatprep.subr.mxu0 0.0
        %954 = vmatpush1.msra.mxu0 0.0
        %955 = vmatprep.subr.mxu0 0.0
        %956 = vmatpush1.msra.mxu0 0.0
        %957 = vmatprep.subr.mxu0 0.0
        %958 = vmatpush1.msra.mxu0 0.0
        %959 = vmatprep.subr.mxu0 0.0
        %960 = vmatpush1.msra.mxu0 0.0
        %961 = vmatprep.subr.mxu0 0.0
        %962 = vmatpush1.msra.mxu0 0.0
        %963 = vmatprep.subr.mxu0 0.0
        %964 = vmatpush1.msra.mxu0 0.0
        %965 = vmatprep.subr.mxu0 0.0
        %966 = vmatpush1.msra.mxu0 0.0
        %967 = vmatprep.subr.mxu0 0.0
        %968 = vmatpush1.msra.mxu0 0.0
        %969 = vmatprep.subr.mxu0 0.0
        %970 = vmatpush1.msra.mxu0 0.0
        %971 = vmatprep.subr.mxu0 0.0
        %972 = vmatpush1.msra.mxu0 0.0
        %973 = vmatprep.subr.mxu0 0.0
        %974 = vmatpush1.msra.mxu0 0.0
        %975 = vmatprep.subr.mxu0 0.0
        %976 = vmatpush1.msra.mxu0 0.0
        %977 = vmatprep.subr.mxu0 0.0
        %978 = vmatpush1.msra.mxu0 0.0
        %979 = vmatprep.subr.mxu0 0.0
        %980 = vmatpush1.msra.mxu0 0.0
        %981 = vmatprep.subr.mxu0 0.0
        %982 = vmatpush1.msra.mxu0 0.0
        %983 = vmatprep.subr.mxu0 0.0
        %984 = vmatpush1.msra.mxu0 0.0
        %985 = vmatprep.subr.mxu0 0.0
        %986 = vmatpush1.msra.mxu0 0.0
        %987 = vmatprep.subr.mxu0 0.0
        %988 = vmatpush1.msra.mxu0 0.0
        %989 = vmatprep.mubr.f32.mxu0 0.0
        %990 = vmatmul.mubr.f32.gmra.mrb[0].mxu0 %v923
        %v991 = vpop.f32.mrb[0].mxu0
        %v992 = vadd.f32 0.0, %v991
        %v993 = vpop.f32.mrb[0].mxu0
        %994 = vdwg.mxu0
        %995 = vrot.lane.b32.xlu0 %v551, 64
        %v996 = vpop.permute.xlu0 %995
        %v999 = vsel %vm558, %v914, 0
        %1001 = vmatprep.subr.mxu0 0.0
        %1002 = vmatpush1.msra.mxu0 %v996
        %1003 = vmatprep.subr.mxu0 0.0
        %1004 = vmatpush1.msra.mxu0 0.0
        %1005 = vmatprep.subr.mxu0 0.0
        %1006 = vmatpush1.msra.mxu0 0.0
        %1007 = vmatprep.subr.mxu0 0.0
        %1008 = vmatpush1.msra.mxu0 0.0
        %1009 = vmatprep.subr.mxu0 0.0
        %1010 = vmatpush1.msra.mxu0 0.0
        %1011 = vmatprep.subr.mxu0 0.0
        %1012 = vmatpush1.msra.mxu0 0.0
        %1013 = vmatprep.subr.mxu0 0.0
        %1014 = vmatpush1.msra.mxu0 0.0
        %1015 = vmatprep.subr.mxu0 0.0
        %1016 = vmatpush1.msra.mxu0 0.0
        %1017 = vmatprep.subr.mxu0 0.0
        %1018 = vmatpush1.msra.mxu0 0.0
        %1019 = vmatprep.subr.mxu0 0.0
        %1020 = vmatpush1.msra.mxu0 0.0
        %1021 = vmatprep.subr.mxu0 0.0
        %1022 = vmatpush1.msra.mxu0 0.0
        %1023 = vmatprep.subr.mxu0 0.0
        %1024 = vmatpush1.msra.mxu0 0.0
        %1025 = vmatprep.subr.mxu0 0.0
        %1026 = vmatpush1.msra.mxu0 0.0
        %1027 = vmatprep.subr.mxu0 0.0
        %1028 = vmatpush1.msra.mxu0 0.0
        %1029 = vmatprep.subr.mxu0 0.0
        %1030 = vmatpush1.msra.mxu0 0.0
        %1031 = vmatprep.subr.mxu0 0.0
        %1032 = vmatpush1.msra.mxu0 0.0
        %1033 = vmatprep.subr.mxu0 0.0
        %1034 = vmatpush1.msra.mxu0 0.0
        %1035 = vmatprep.subr.mxu0 0.0
        %1036 = vmatpush1.msra.mxu0 0.0
        %1037 = vmatprep.subr.mxu0 0.0
        %1038 = vmatpush1.msra.mxu0 0.0
        %1039 = vmatprep.subr.mxu0 0.0
        %1040 = vmatpush1.msra.mxu0 0.0
        %1041 = vmatprep.subr.mxu0 0.0
        %1042 = vmatpush1.msra.mxu0 0.0
        %1043 = vmatprep.subr.mxu0 0.0
        %1044 = vmatpush1.msra.mxu0 0.0
        %1045 = vmatprep.subr.mxu0 0.0
        %1046 = vmatpush1.msra.mxu0 0.0
        %1047 = vmatprep.subr.mxu0 0.0
        %1048 = vmatpush1.msra.mxu0 0.0
        %1049 = vmatprep.subr.mxu0 0.0
        %1050 = vmatpush1.msra.mxu0 0.0
        %1051 = vmatprep.subr.mxu0 0.0
        %1052 = vmatpush1.msra.mxu0 0.0
        %1053 = vmatprep.subr.mxu0 0.0
        %1054 = vmatpush1.msra.mxu0 0.0
        %1055 = vmatprep.subr.mxu0 0.0
        %1056 = vmatpush1.msra.mxu0 0.0
        %1057 = vmatprep.subr.mxu0 0.0
        %1058 = vmatpush1.msra.mxu0 0.0
        %1059 = vmatprep.subr.mxu0 0.0
        %1060 = vmatpush1.msra.mxu0 0.0
        %1061 = vmatprep.subr.mxu0 0.0
        %1062 = vmatpush1.msra.mxu0 0.0
        %1063 = vmatprep.subr.mxu0 0.0
        %1064 = vmatpush1.msra.mxu0 0.0
        %1065 = vmatprep.mubr.f32.mxu0 0.0
        %1066 = vmatmul.mubr.f32.gmra.mrb[0].mxu0 %v999
        %v1067 = vpop.f32.mrb[0].mxu0
        %v1068 = vadd.f32 0.0, %v1067
        %v1069 = vpop.f32.mrb[0].mxu0
        %1070 = vdwg.mxu0
        %1071 = vrot.lane.b32.xlu0 %v553, 64
        %v1072 = vpop.permute.xlu0 %1071
        %v1075 = vsel %vm558, %v916, 0
        %1077 = vmatprep.subr.mxu0 0.0
        %1078 = vmatpush1.msra.mxu0 %v1072
        %1079 = vmatprep.subr.mxu0 0.0
        %1080 = vmatpush1.msra.mxu0 0.0
        %1081 = vmatprep.subr.mxu0 0.0
        %1082 = vmatpush1.msra.mxu0 0.0
        %1083 = vmatprep.subr.mxu0 0.0
        %1084 = vmatpush1.msra.mxu0 0.0
        %1085 = vmatprep.subr.mxu0 0.0
        %1086 = vmatpush1.msra.mxu0 0.0
        %1087 = vmatprep.subr.mxu0 0.0
        %1088 = vmatpush1.msra.mxu0 0.0
        %1089 = vmatprep.subr.mxu0 0.0
        %1090 = vmatpush1.msra.mxu0 0.0
        %1091 = vmatprep.subr.mxu0 0.0
        %1092 = vmatpush1.msra.mxu0 0.0
        %1093 = vmatprep.subr.mxu0 0.0
        %1094 = vmatpush1.msra.mxu0 0.0
        %1095 = vmatprep.subr.mxu0 0.0
        %1096 = vmatpush1.msra.mxu0 0.0
        %1097 = vmatprep.subr.mxu0 0.0
        %1098 = vmatpush1.msra.mxu0 0.0
        %1099 = vmatprep.subr.mxu0 0.0
        %1100 = vmatpush1.msra.mxu0 0.0
        %1101 = vmatprep.subr.mxu0 0.0
        %1102 = vmatpush1.msra.mxu0 0.0
        %1103 = vmatprep.subr.mxu0 0.0
        %1104 = vmatpush1.msra.mxu0 0.0
        %1105 = vmatprep.subr.mxu0 0.0
        %1106 = vmatpush1.msra.mxu0 0.0
        %1107 = vmatprep.subr.mxu0 0.0
        %1108 = vmatpush1.msra.mxu0 0.0
        %1109 = vmatprep.subr.mxu0 0.0
        %1110 = vmatpush1.msra.mxu0 0.0
        %1111 = vmatprep.subr.mxu0 0.0
        %1112 = vmatpush1.msra.mxu0 0.0
        %1113 = vmatprep.subr.mxu0 0.0
        %1114 = vmatpush1.msra.mxu0 0.0
        %1115 = vmatprep.subr.mxu0 0.0
        %1116 = vmatpush1.msra.mxu0 0.0
        %1117 = vmatprep.subr.mxu0 0.0
        %1118 = vmatpush1.msra.mxu0 0.0
        %1119 = vmatprep.subr.mxu0 0.0
        %1120 = vmatpush1.msra.mxu0 0.0
        %1121 = vmatprep.subr.mxu0 0.0
        %1122 = vmatpush1.msra.mxu0 0.0
        %1123 = vmatprep.subr.mxu0 0.0
        %1124 = vmatpush1.msra.mxu0 0.0
        %1125 = vmatprep.subr.mxu0 0.0
        %1126 = vmatpush1.msra.mxu0 0.0
        %1127 = vmatprep.subr.mxu0 0.0
        %1128 = vmatpush1.msra.mxu0 0.0
        %1129 = vmatprep.subr.mxu0 0.0
        %1130 = vmatpush1.msra.mxu0 0.0
        %1131 = vmatprep.subr.mxu0 0.0
        %1132 = vmatpush1.msra.mxu0 0.0
        %1133 = vmatprep.subr.mxu0 0.0
        %1134 = vmatpush1.msra.mxu0 0.0
        %1135 = vmatprep.subr.mxu0 0.0
        %1136 = vmatpush1.msra.mxu0 0.0
        %1137 = vmatprep.subr.mxu0 0.0
        %1138 = vmatpush1.msra.mxu0 0.0
        %1139 = vmatprep.subr.mxu0 0.0
        %1140 = vmatpush1.msra.mxu0 0.0
        %1141 = vmatprep.mubr.f32.mxu0 0.0
        %1142 = vmatmul.mubr.f32.gmra.mrb[0].mxu0 %v1075
        %v1143 = vpop.f32.mrb[0].mxu0
        %v1144 = vadd.f32 0.0, %v1143
        %v1145 = vpop.f32.mrb[0].mxu0
        %1146 = vdwg.mxu0
        %1147 = vrot.lane.b32.xlu0 %v555, 64
        %v1148 = vpop.permute.xlu0 %1147
        %v1151 = vsel %vm558, %v918, 0
        %1153 = vmatprep.subr.mxu0 0.0
        %1154 = vmatpush1.msra.mxu0 %v1148
        %1155 = vmatprep.subr.mxu0 0.0
        %1156 = vmatpush1.msra.mxu0 0.0
        %1157 = vmatprep.subr.mxu0 0.0
        %1158 = vmatpush1.msra.mxu0 0.0
        %1159 = vmatprep.subr.mxu0 0.0
        %1160 = vmatpush1.msra.mxu0 0.0
        %1161 = vmatprep.subr.mxu0 0.0
        %1162 = vmatpush1.msra.mxu0 0.0
        %1163 = vmatprep.subr.mxu0 0.0
        %1164 = vmatpush1.msra.mxu0 0.0
        %1165 = vmatprep.subr.mxu0 0.0
        %1166 = vmatpush1.msra.mxu0 0.0
        %1167 = vmatprep.subr.mxu0 0.0
        %1168 = vmatpush1.msra.mxu0 0.0
        %1169 = vmatprep.subr.mxu0 0.0
        %1170 = vmatpush1.msra.mxu0 0.0
        %1171 = vmatprep.subr.mxu0 0.0
        %1172 = vmatpush1.msra.mxu0 0.0
        %1173 = vmatprep.subr.mxu0 0.0
        %1174 = vmatpush1.msra.mxu0 0.0
        %1175 = vmatprep.subr.mxu0 0.0
        %1176 = vmatpush1.msra.mxu0 0.0
        %1177 = vmatprep.subr.mxu0 0.0
        %1178 = vmatpush1.msra.mxu0 0.0
        %1179 = vmatprep.subr.mxu0 0.0
        %1180 = vmatpush1.msra.mxu0 0.0
        %1181 = vmatprep.subr.mxu0 0.0
        %1182 = vmatpush1.msra.mxu0 0.0
        %1183 = vmatprep.subr.mxu0 0.0
        %1184 = vmatpush1.msra.mxu0 0.0
        %1185 = vmatprep.subr.mxu0 0.0
        %1186 = vmatpush1.msra.mxu0 0.0
        %1187 = vmatprep.subr.mxu0 0.0
        %1188 = vmatpush1.msra.mxu0 0.0
        %1189 = vmatprep.subr.mxu0 0.0
        %1190 = vmatpush1.msra.mxu0 0.0
        %1191 = vmatprep.subr.mxu0 0.0
        %1192 = vmatpush1.msra.mxu0 0.0
        %1193 = vmatprep.subr.mxu0 0.0
        %1194 = vmatpush1.msra.mxu0 0.0
        %1195 = vmatprep.subr.mxu0 0.0
        %1196 = vmatpush1.msra.mxu0 0.0
        %1197 = vmatprep.subr.mxu0 0.0
        %1198 = vmatpush1.msra.mxu0 0.0
        %1199 = vmatprep.subr.mxu0 0.0
        %1200 = vmatpush1.msra.mxu0 0.0
        %1201 = vmatprep.subr.mxu0 0.0
        %1202 = vmatpush1.msra.mxu0 0.0
        %1203 = vmatprep.subr.mxu0 0.0
        %1204 = vmatpush1.msra.mxu0 0.0
        %1205 = vmatprep.subr.mxu0 0.0
        %1206 = vmatpush1.msra.mxu0 0.0
        %1207 = vmatprep.subr.mxu0 0.0
        %1208 = vmatpush1.msra.mxu0 0.0
        %1209 = vmatprep.subr.mxu0 0.0
        %1210 = vmatpush1.msra.mxu0 0.0
        %1211 = vmatprep.subr.mxu0 0.0
        %1212 = vmatpush1.msra.mxu0 0.0
        %1213 = vmatprep.subr.mxu0 0.0
        %1214 = vmatpush1.msra.mxu0 0.0
        %1215 = vmatprep.subr.mxu0 0.0
        %1216 = vmatpush1.msra.mxu0 0.0
        %1217 = vmatprep.mubr.f32.mxu0 0.0
        %1218 = vmatmul.mubr.f32.gmra.mrb[0].mxu0 %v1151
        %v1219 = vpop.f32.mrb[0].mxu0
        %v1220 = vadd.f32 0.0, %v1219
        %v1221 = vpop.f32.mrb[0].mxu0
        %1222 = vdwg.mxu0
        %v1224 = vsel %vm558, %v992, 0
        %1226 = vmatprep.subr.mxu0 0.0
        %1227 = vmatpush1.msra.mxu0 %v454
        %1228 = vmatprep.subr.mxu0 0.0
        %1229 = vmatpush1.msra.mxu0 0.0
        %1230 = vmatprep.subr.mxu0 0.0
        %1231 = vmatpush1.msra.mxu0 0.0
        %1232 = vmatprep.subr.mxu0 0.0
        %1233 = vmatpush1.msra.mxu0 0.0
        %1234 = vmatprep.subr.mxu0 0.0
        %1235 = vmatpush1.msra.mxu0 0.0
        %1236 = vmatprep.subr.mxu0 0.0
        %1237 = vmatpush1.msra.mxu0 0.0
        %1238 = vmatprep.subr.mxu0 0.0
        %1239 = vmatpush1.msra.mxu0 0.0
        %1240 = vmatprep.subr.mxu0 0.0
        %1241 = vmatpush1.msra.mxu0 0.0
        %1242 = vmatprep.subr.mxu0 0.0
        %1243 = vmatpush1.msra.mxu0 0.0
        %1244 = vmatprep.subr.mxu0 0.0
        %1245 = vmatpush1.msra.mxu0 0.0
        %1246 = vmatprep.subr.mxu0 0.0
        %1247 = vmatpush1.msra.mxu0 0.0
        %1248 = vmatprep.subr.mxu0 0.0
        %1249 = vmatpush1.msra.mxu0 0.0
        %1250 = vmatprep.subr.mxu0 0.0
        %1251 = vmatpush1.msra.mxu0 0.0
        %1252 = vmatprep.subr.mxu0 0.0
        %1253 = vmatpush1.msra.mxu0 0.0
        %1254 = vmatprep.subr.mxu0 0.0
        %1255 = vmatpush1.msra.mxu0 0.0
        %1256 = vmatprep.subr.mxu0 0.0
        %1257 = vmatpush1.msra.mxu0 0.0
        %1258 = vmatprep.subr.mxu0 0.0
        %1259 = vmatpush1.msra.mxu0 0.0
        %1260 = vmatprep.subr.mxu0 0.0
        %1261 = vmatpush1.msra.mxu0 0.0
        %1262 = vmatprep.subr.mxu0 0.0
        %1263 = vmatpush1.msra.mxu0 0.0
        %1264 = vmatprep.subr.mxu0 0.0
        %1265 = vmatpush1.msra.mxu0 0.0
        %1266 = vmatprep.subr.mxu0 0.0
        %1267 = vmatpush1.msra.mxu0 0.0
        %1268 = vmatprep.subr.mxu0 0.0
        %1269 = vmatpush1.msra.mxu0 0.0
        %1270 = vmatprep.subr.mxu0 0.0
        %1271 = vmatpush1.msra.mxu0 0.0
        %1272 = vmatprep.subr.mxu0 0.0
        %1273 = vmatpush1.msra.mxu0 0.0
        %1274 = vmatprep.subr.mxu0 0.0
        %1275 = vmatpush1.msra.mxu0 0.0
        %1276 = vmatprep.subr.mxu0 0.0
        %1277 = vmatpush1.msra.mxu0 0.0
        %1278 = vmatprep.subr.mxu0 0.0
        %1279 = vmatpush1.msra.mxu0 0.0
        %1280 = vmatprep.subr.mxu0 0.0
        %1281 = vmatpush1.msra.mxu0 0.0
        %1282 = vmatprep.subr.mxu0 0.0
        %1283 = vmatpush1.msra.mxu0 0.0
        %1284 = vmatprep.subr.mxu0 0.0
        %1285 = vmatpush1.msra.mxu0 0.0
        %1286 = vmatprep.subr.mxu0 0.0
        %1287 = vmatpush1.msra.mxu0 0.0
        %1288 = vmatprep.subr.mxu0 0.0
        %1289 = vmatpush1.msra.mxu0 0.0
        %1290 = vmatprep.mubr.f32.mxu0 0.0
        %1291 = vmatmul.mubr.f32.gmra.mrb[0].mxu0 %v1224
        %v1292 = vpop.f32.mrb[0].mxu0
        %v1293 = vadd.f32 0.0, %v1292
        %v1294 = vpop.f32.mrb[0].mxu0
        %1295 = vdwg.mxu0
        %v1297 = vsel %vm558, %v1068, 0
        %1299 = vmatprep.subr.mxu0 0.0
        %1300 = vmatpush1.msra.mxu0 %v455
        %1301 = vmatprep.subr.mxu0 0.0
        %1302 = vmatpush1.msra.mxu0 0.0
        %1303 = vmatprep.subr.mxu0 0.0
        %1304 = vmatpush1.msra.mxu0 0.0
        %1305 = vmatprep.subr.mxu0 0.0
        %1306 = vmatpush1.msra.mxu0 0.0
        %1307 = vmatprep.subr.mxu0 0.0
        %1308 = vmatpush1.msra.mxu0 0.0
        %1309 = vmatprep.subr.mxu0 0.0
        %1310 = vmatpush1.msra.mxu0 0.0
        %1311 = vmatprep.subr.mxu0 0.0
        %1312 = vmatpush1.msra.mxu0 0.0
        %1313 = vmatprep.subr.mxu0 0.0
        %1314 = vmatpush1.msra.mxu0 0.0
        %1315 = vmatprep.subr.mxu0 0.0
        %1316 = vmatpush1.msra.mxu0 0.0
        %1317 = vmatprep.subr.mxu0 0.0
        %1318 = vmatpush1.msra.mxu0 0.0
        %1319 = vmatprep.subr.mxu0 0.0
        %1320 = vmatpush1.msra.mxu0 0.0
        %1321 = vmatprep.subr.mxu0 0.0
        %1322 = vmatpush1.msra.mxu0 0.0
        %1323 = vmatprep.subr.mxu0 0.0
        %1324 = vmatpush1.msra.mxu0 0.0
        %1325 = vmatprep.subr.mxu0 0.0
        %1326 = vmatpush1.msra.mxu0 0.0
        %1327 = vmatprep.subr.mxu0 0.0
        %1328 = vmatpush1.msra.mxu0 0.0
        %1329 = vmatprep.subr.mxu0 0.0
        %1330 = vmatpush1.msra.mxu0 0.0
        %1331 = vmatprep.subr.mxu0 0.0
        %1332 = vmatpush1.msra.mxu0 0.0
        %1333 = vmatprep.subr.mxu0 0.0
        %1334 = vmatpush1.msra.mxu0 0.0
        %1335 = vmatprep.subr.mxu0 0.0
        %1336 = vmatpush1.msra.mxu0 0.0
        %1337 = vmatprep.subr.mxu0 0.0
        %1338 = vmatpush1.msra.mxu0 0.0
        %1339 = vmatprep.subr.mxu0 0.0
        %1340 = vmatpush1.msra.mxu0 0.0
        %1341 = vmatprep.subr.mxu0 0.0
        %1342 = vmatpush1.msra.mxu0 0.0
        %1343 = vmatprep.subr.mxu0 0.0
        %1344 = vmatpush1.msra.mxu0 0.0
        %1345 = vmatprep.subr.mxu0 0.0
        %1346 = vmatpush1.msra.mxu0 0.0
        %1347 = vmatprep.subr.mxu0 0.0
        %1348 = vmatpush1.msra.mxu0 0.0
        %1349 = vmatprep.subr.mxu0 0.0
        %1350 = vmatpush1.msra.mxu0 0.0
        %1351 = vmatprep.subr.mxu0 0.0
        %1352 = vmatpush1.msra.mxu0 0.0
        %1353 = vmatprep.subr.mxu0 0.0
        %1354 = vmatpush1.msra.mxu0 0.0
        %1355 = vmatprep.subr.mxu0 0.0
        %1356 = vmatpush1.msra.mxu0 0.0
        %1357 = vmatprep.subr.mxu0 0.0
        %1358 = vmatpush1.msra.mxu0 0.0
        %1359 = vmatprep.subr.mxu0 0.0
        %1360 = vmatpush1.msra.mxu0 0.0
        %1361 = vmatprep.subr.mxu0 0.0
        %1362 = vmatpush1.msra.mxu0 0.0
        %1363 = vmatprep.mubr.f32.mxu0 0.0
        %1364 = vmatmul.mubr.f32.gmra.mrb[0].mxu0 %v1297
        %v1365 = vpop.f32.mrb[0].mxu0
        %v1366 = vadd.f32 0.0, %v1365
        %v1367 = vpop.f32.mrb[0].mxu0
        %1368 = vdwg.mxu0
        %v1370 = vsel %vm558, %v1144, 0
        %1372 = vmatprep.subr.mxu0 0.0
        %1373 = vmatpush1.msra.mxu0 %v456
        %1374 = vmatprep.subr.mxu0 0.0
        %1375 = vmatpush1.msra.mxu0 0.0
        %1376 = vmatprep.subr.mxu0 0.0
        %1377 = vmatpush1.msra.mxu0 0.0
        %1378 = vmatprep.subr.mxu0 0.0
        %1379 = vmatpush1.msra.mxu0 0.0
        %1380 = vmatprep.subr.mxu0 0.0
        %1381 = vmatpush1.msra.mxu0 0.0
        %1382 = vmatprep.subr.mxu0 0.0
        %1383 = vmatpush1.msra.mxu0 0.0
        %1384 = vmatprep.subr.mxu0 0.0
        %1385 = vmatpush1.msra.mxu0 0.0
        %1386 = vmatprep.subr.mxu0 0.0
        %1387 = vmatpush1.msra.mxu0 0.0
        %1388 = vmatprep.subr.mxu0 0.0
        %1389 = vmatpush1.msra.mxu0 0.0
        %1390 = vmatprep.subr.mxu0 0.0
        %1391 = vmatpush1.msra.mxu0 0.0
        %1392 = vmatprep.subr.mxu0 0.0
        %1393 = vmatpush1.msra.mxu0 0.0
        %1394 = vmatprep.subr.mxu0 0.0
        %1395 = vmatpush1.msra.mxu0 0.0
        %1396 = vmatprep.subr.mxu0 0.0
        %1397 = vmatpush1.msra.mxu0 0.0
        %1398 = vmatprep.subr.mxu0 0.0
        %1399 = vmatpush1.msra.mxu0 0.0
        %1400 = vmatprep.subr.mxu0 0.0
        %1401 = vmatpush1.msra.mxu0 0.0
        %1402 = vmatprep.subr.mxu0 0.0
        %1403 = vmatpush1.msra.mxu0 0.0
        %1404 = vmatprep.subr.mxu0 0.0
        %1405 = vmatpush1.msra.mxu0 0.0
        %1406 = vmatprep.subr.mxu0 0.0
        %1407 = vmatpush1.msra.mxu0 0.0
        %1408 = vmatprep.subr.mxu0 0.0
        %1409 = vmatpush1.msra.mxu0 0.0
        %1410 = vmatprep.subr.mxu0 0.0
        %1411 = vmatpush1.msra.mxu0 0.0
        %1412 = vmatprep.subr.mxu0 0.0
        %1413 = vmatpush1.msra.mxu0 0.0
        %1414 = vmatprep.subr.mxu0 0.0
        %1415 = vmatpush1.msra.mxu0 0.0
        %1416 = vmatprep.subr.mxu0 0.0
        %1417 = vmatpush1.msra.mxu0 0.0
        %1418 = vmatprep.subr.mxu0 0.0
        %1419 = vmatpush1.msra.mxu0 0.0
        %1420 = vmatprep.subr.mxu0 0.0
        %1421 = vmatpush1.msra.mxu0 0.0
        %1422 = vmatprep.subr.mxu0 0.0
        %1423 = vmatpush1.msra.mxu0 0.0
        %1424 = vmatprep.subr.mxu0 0.0
        %1425 = vmatpush1.msra.mxu0 0.0
        %1426 = vmatprep.subr.mxu0 0.0
        %1427 = vmatpush1.msra.mxu0 0.0
        %1428 = vmatprep.subr.mxu0 0.0
        %1429 = vmatpush1.msra.mxu0 0.0
        %1430 = vmatprep.subr.mxu0 0.0
        %1431 = vmatpush1.msra.mxu0 0.0
        %1432 = vmatprep.subr.mxu0 0.0
        %1433 = vmatpush1.msra.mxu0 0.0
        %1434 = vmatprep.subr.mxu0 0.0
        %1435 = vmatpush1.msra.mxu0 0.0
        %1436 = vmatprep.mubr.f32.mxu0 0.0
        %1437 = vmatmul.mubr.f32.gmra.mrb[0].mxu0 %v1370
        %v1438 = vpop.f32.mrb[0].mxu0
        %v1439 = vadd.f32 0.0, %v1438
        %v1440 = vpop.f32.mrb[0].mxu0
        %1441 = vdwg.mxu0
        %v1443 = vsel %vm558, %v1220, 0
        %1445 = vmatprep.subr.mxu0 0.0
        %1446 = vmatpush1.msra.mxu0 %v457
        %1447 = vmatprep.subr.mxu0 0.0
        %1448 = vmatpush1.msra.mxu0 0.0
        %1449 = vmatprep.subr.mxu0 0.0
        %1450 = vmatpush1.msra.mxu0 0.0
        %1451 = vmatprep.subr.mxu0 0.0
        %1452 = vmatpush1.msra.mxu0 0.0
        %1453 = vmatprep.subr.mxu0 0.0
        %1454 = vmatpush1.msra.mxu0 0.0
        %1455 = vmatprep.subr.mxu0 0.0
        %1456 = vmatpush1.msra.mxu0 0.0
        %1457 = vmatprep.subr.mxu0 0.0
        %1458 = vmatpush1.msra.mxu0 0.0
        %1459 = vmatprep.subr.mxu0 0.0
        %1460 = vmatpush1.msra.mxu0 0.0
        %1461 = vmatprep.subr.mxu0 0.0
        %1462 = vmatpush1.msra.mxu0 0.0
        %1463 = vmatprep.subr.mxu0 0.0
        %1464 = vmatpush1.msra.mxu0 0.0
        %1465 = vmatprep.subr.mxu0 0.0
        %1466 = vmatpush1.msra.mxu0 0.0
        %1467 = vmatprep.subr.mxu0 0.0
        %1468 = vmatpush1.msra.mxu0 0.0
        %1469 = vmatprep.subr.mxu0 0.0
        %1470 = vmatpush1.msra.mxu0 0.0
        %1471 = vmatprep.subr.mxu0 0.0
        %1472 = vmatpush1.msra.mxu0 0.0
        %1473 = vmatprep.subr.mxu0 0.0
        %1474 = vmatpush1.msra.mxu0 0.0
        %1475 = vmatprep.subr.mxu0 0.0
        %1476 = vmatpush1.msra.mxu0 0.0
        %1477 = vmatprep.subr.mxu0 0.0
        %1478 = vmatpush1.msra.mxu0 0.0
        %1479 = vmatprep.subr.mxu0 0.0
        %1480 = vmatpush1.msra.mxu0 0.0
        %1481 = vmatprep.subr.mxu0 0.0
        %1482 = vmatpush1.msra.mxu0 0.0
        %1483 = vmatprep.subr.mxu0 0.0
        %1484 = vmatpush1.msra.mxu0 0.0
        %1485 = vmatprep.subr.mxu0 0.0
        %1486 = vmatpush1.msra.mxu0 0.0
        %1487 = vmatprep.subr.mxu0 0.0
        %1488 = vmatpush1.msra.mxu0 0.0
        %1489 = vmatprep.subr.mxu0 0.0
        %1490 = vmatpush1.msra.mxu0 0.0
        %1491 = vmatprep.subr.mxu0 0.0
        %1492 = vmatpush1.msra.mxu0 0.0
        %1493 = vmatprep.subr.mxu0 0.0
        %1494 = vmatpush1.msra.mxu0 0.0
        %1495 = vmatprep.subr.mxu0 0.0
        %1496 = vmatpush1.msra.mxu0 0.0
        %1497 = vmatprep.subr.mxu0 0.0
        %1498 = vmatpush1.msra.mxu0 0.0
        %1499 = vmatprep.subr.mxu0 0.0
        %1500 = vmatpush1.msra.mxu0 0.0
        %1501 = vmatprep.subr.mxu0 0.0
        %1502 = vmatpush1.msra.mxu0 0.0
        %1503 = vmatprep.subr.mxu0 0.0
        %1504 = vmatpush1.msra.mxu0 0.0
        %1505 = vmatprep.subr.mxu0 0.0
        %1506 = vmatpush1.msra.mxu0 0.0
        %1507 = vmatprep.subr.mxu0 0.0
        %1508 = vmatpush1.msra.mxu0 0.0
        %1509 = vmatprep.mubr.f32.mxu0 0.0
        %1510 = vmatmul.mubr.f32.gmra.mrb[0].mxu0 %v1443
        %v1511 = vpop.f32.mrb[0].mxu0
        %v1512 = vadd.f32 0.0, %v1511
        %v1513 = vpop.f32.mrb[0].mxu0
        %1514 = vdwg.mxu0
        %v1515 = vsel %vm475, %v1293, 0.0
        %v1516 = vsel %vm475, %v1366, 0.0
        %v1517 = vadd.f32 %v1515, %v1516
        %v1518 = vsel %vm475, %v1439, 0.0
        %v1519 = vadd.f32 %v1517, %v1518
        %v1520 = vsel %vm475, %v1512, 0.0
        %v1521 = vadd.f32 %v1519, %v1520
        %v1522 = vlaneseq
        %v1523 = vshrl.u32 %v1522, 7
        %v1524 = vsub.s32 1, %v1523
        %v1525 = vrot.slane %v470, %v1524
        %v1526 = vadd.f32 %v1521, %v1525
        %v1527 = vadd.f32 %v1526, %v446
        %v1528 = vsel %vm475, %v1527, 0.0
        %1529 = vadd.xlane.f32.xlu0 %v1528
        %v1530 = vpop.xlane.xlu0 %1529
        %v1531 = vrcp.pop 32.0
        %v1532 = vmul.f32 %v1530, %v1531
        %v1533 = vsub.f32 %v1527, %v1532
        %v1534 = vmul.f32 %v1533, %v1533
        %v1535 = vsel %vm475, %v1534, 0.0
        %1536 = vadd.xlane.f32.xlu0 %v1535
        %v1537 = vpop.xlane.xlu0 %1536
        %v1538 = vmul.f32 %v1537, %v1531
        %v1539 = vadd.f32 %v1538, 1e-12
        %v1540 = vrsqrt.pop %v1539
        %v1541 = vmul.f32 %v1533, %v1540
        %v1542 = vlaneseq
        %v1543 = vshrl.u32 %v1542, 7
        %v1544 = vsub.s32 2, %v1543
        %v1545 = vrot.slane %v470, %v1544
        %v1546 = vmul.f32 %v1541, %v1545
        %v1547 = vlaneseq
        %v1548 = vshrl.u32 %v1547, 7
        %v1549 = vsub.s32 3, %v1548
        %v1550 = vrot.slane %v470, %v1549
        %v1551 = vadd.f32 %v1546, %v1550
        %v1552 = vlaneseq
        %v1553 = vshrl.u32 %v1552, 7
        %v1554 = vsub.s32 4, %v1553
        %v1555 = vrot.slane %v470, %v1554
        %v1557 = vsel %vm475, %v1551, 0
        %1559 = vmatprep.subr.mxu0 0.0
        %1560 = vmatpush1.msra.mxu0 %v458
        %1561 = vmatprep.subr.mxu0 0.0
        %1562 = vmatpush1.msra.mxu0 %v459
        %1563 = vmatprep.subr.mxu0 0.0
        %1564 = vmatpush1.msra.mxu0 %v460
        %1565 = vmatprep.subr.mxu0 0.0
        %1566 = vmatpush1.msra.mxu0 %v461
        %1567 = vmatprep.subr.mxu0 0.0
        %1568 = vmatpush1.msra.mxu0 0.0
        %1569 = vmatprep.subr.mxu0 0.0
        %1570 = vmatpush1.msra.mxu0 0.0
        %1571 = vmatprep.subr.mxu0 0.0
        %1572 = vmatpush1.msra.mxu0 0.0
        %1573 = vmatprep.subr.mxu0 0.0
        %1574 = vmatpush1.msra.mxu0 0.0
        %1575 = vmatprep.subr.mxu0 0.0
        %1576 = vmatpush1.msra.mxu0 0.0
        %1577 = vmatprep.subr.mxu0 0.0
        %1578 = vmatpush1.msra.mxu0 0.0
        %1579 = vmatprep.subr.mxu0 0.0
        %1580 = vmatpush1.msra.mxu0 0.0
        %1581 = vmatprep.subr.mxu0 0.0
        %1582 = vmatpush1.msra.mxu0 0.0
        %1583 = vmatprep.subr.mxu0 0.0
        %1584 = vmatpush1.msra.mxu0 0.0
        %1585 = vmatprep.subr.mxu0 0.0
        %1586 = vmatpush1.msra.mxu0 0.0
        %1587 = vmatprep.subr.mxu0 0.0
        %1588 = vmatpush1.msra.mxu0 0.0
        %1589 = vmatprep.subr.mxu0 0.0
        %1590 = vmatpush1.msra.mxu0 0.0
        %1591 = vmatprep.subr.mxu0 0.0
        %1592 = vmatpush1.msra.mxu0 0.0
        %1593 = vmatprep.subr.mxu0 0.0
        %1594 = vmatpush1.msra.mxu0 0.0
        %1595 = vmatprep.subr.mxu0 0.0
        %1596 = vmatpush1.msra.mxu0 0.0
        %1597 = vmatprep.subr.mxu0 0.0
        %1598 = vmatpush1.msra.mxu0 0.0
        %1599 = vmatprep.subr.mxu0 0.0
        %1600 = vmatpush1.msra.mxu0 0.0
        %1601 = vmatprep.subr.mxu0 0.0
        %1602 = vmatpush1.msra.mxu0 0.0
        %1603 = vmatprep.subr.mxu0 0.0
        %1604 = vmatpush1.msra.mxu0 0.0
        %1605 = vmatprep.subr.mxu0 0.0
        %1606 = vmatpush1.msra.mxu0 0.0
        %1607 = vmatprep.subr.mxu0 0.0
        %1608 = vmatpush1.msra.mxu0 0.0
        %1609 = vmatprep.subr.mxu0 0.0
        %1610 = vmatpush1.msra.mxu0 0.0
        %1611 = vmatprep.subr.mxu0 0.0
        %1612 = vmatpush1.msra.mxu0 0.0
        %1613 = vmatprep.subr.mxu0 0.0
        %1614 = vmatpush1.msra.mxu0 0.0
        %1615 = vmatprep.subr.mxu0 0.0
        %1616 = vmatpush1.msra.mxu0 0.0
        %1617 = vmatprep.subr.mxu0 0.0
        %1618 = vmatpush1.msra.mxu0 0.0
        %1619 = vmatprep.subr.mxu0 0.0
        %1620 = vmatpush1.msra.mxu0 0.0
        %1621 = vmatprep.subr.mxu0 0.0
        %1622 = vmatpush1.msra.mxu0 0.0
        %1623 = vmatprep.mubr.f32.mxu0 0.0
        %1624 = vmatmul.mubr.f32.gmra.mrb[0].mxu0 %v1557
        %v1625 = vpop.f32.mrb[0].mxu0
        %v1626 = vadd.f32 %v1555, %v1625
        %v1627 = vpop.f32.mrb[0].mxu0
        %1628 = vdwg.mxu0
        %v1629 = vmul.f32 %v1626, 0.5
        %v1630 = vmul.f32 %v1626, 0.044715
        %v1631 = vmul.f32 %v1630, %v1626
        %v1632 = vmul.f32 %v1631, %v1626
        %v1633 = vadd.f32 %v1626, %v1632
        %v1634 = vmul.f32 %v1633, 0.7978845
        %v1635 = vtanh.pop %v1634
        %v1636 = vadd.f32 %v1635, 1.0
        %v1637 = vmul.f32 %v1629, %v1636
        %v1638 = vlaneseq
        %v1639 = vshrl.u32 %v1638, 7
        %v1640 = vsub.s32 5, %v1639
        %v1641 = vrot.slane %v470, %v1640
        %vm1642 = vcmask 523264
        %v1644 = vsel %vm1642, %v1637, 0
        %1646 = vmatprep.subr.mxu0 0.0
        %1647 = vmatpush1.msra.mxu0 %v462
        %1648 = vmatprep.subr.mxu0 0.0
        %1649 = vmatpush1.msra.mxu0 %v463
        %1650 = vmatprep.subr.mxu0 0.0
        %1651 = vmatpush1.msra.mxu0 %v464
        %1652 = vmatprep.subr.mxu0 0.0
        %1653 = vmatpush1.msra.mxu0 %v465
        %1654 = vmatprep.subr.mxu0 0.0
        %1655 = vmatpush1.msra.mxu0 %v466
        %1656 = vmatprep.subr.mxu0 0.0
        %1657 = vmatpush1.msra.mxu0 %v467
        %1658 = vmatprep.subr.mxu0 0.0
        %1659 = vmatpush1.msra.mxu0 %v468
        %1660 = vmatprep.subr.mxu0 0.0
        %1661 = vmatpush1.msra.mxu0 %v469
        %1662 = vmatprep.subr.mxu0 0.0
        %1663 = vmatpush1.msra.mxu0 0.0
        %1664 = vmatprep.subr.mxu0 0.0
        %1665 = vmatpush1.msra.mxu0 0.0
        %1666 = vmatprep.subr.mxu0 0.0
        %1667 = vmatpush1.msra.mxu0 0.0
        %1668 = vmatprep.subr.mxu0 0.0
        %1669 = vmatpush1.msra.mxu0 0.0
        %1670 = vmatprep.subr.mxu0 0.0
        %1671 = vmatpush1.msra.mxu0 0.0
        %1672 = vmatprep.subr.mxu0 0.0
        %1673 = vmatpush1.msra.mxu0 0.0
        %1674 = vmatprep.subr.mxu0 0.0
        %1675 = vmatpush1.msra.mxu0 0.0
        %1676 = vmatprep.subr.mxu0 0.0
        %1677 = vmatpush1.msra.mxu0 0.0
        %1678 = vmatprep.subr.mxu0 0.0
        %1679 = vmatpush1.msra.mxu0 0.0
        %1680 = vmatprep.subr.mxu0 0.0
        %1681 = vmatpush1.msra.mxu0 0.0
        %1682 = vmatprep.subr.mxu0 0.0
        %1683 = vmatpush1.msra.mxu0 0.0
        %1684 = vmatprep.subr.mxu0 0.0
        %1685 = vmatpush1.msra.mxu0 0.0
        %1686 = vmatprep.subr.mxu0 0.0
        %1687 = vmatpush1.msra.mxu0 0.0
        %1688 = vmatprep.subr.mxu0 0.0
        %1689 = vmatpush1.msra.mxu0 0.0
        %1690 = vmatprep.subr.mxu0 0.0
        %1691 = vmatpush1.msra.mxu0 0.0
        %1692 = vmatprep.subr.mxu0 0.0
        %1693 = vmatpush1.msra.mxu0 0.0
        %1694 = vmatprep.subr.mxu0 0.0
        %1695 = vmatpush1.msra.mxu0 0.0
        %1696 = vmatprep.subr.mxu0 0.0
        %1697 = vmatpush1.msra.mxu0 0.0
        %1698 = vmatprep.subr.mxu0 0.0
        %1699 = vmatpush1.msra.mxu0 0.0
        %1700 = vmatprep.subr.mxu0 0.0
        %1701 = vmatpush1.msra.mxu0 0.0
        %1702 = vmatprep.subr.mxu0 0.0
        %1703 = vmatpush1.msra.mxu0 0.0
        %1704 = vmatprep.subr.mxu0 0.0
        %1705 = vmatpush1.msra.mxu0 0.0
        %1706 = vmatprep.subr.mxu0 0.0
        %1707 = vmatpush1.msra.mxu0 0.0
        %1708 = vmatprep.subr.mxu0 0.0
        %1709 = vmatpush1.msra.mxu0 0.0
        %1710 = vmatprep.mubr.f32.mxu0 0.0
        %1711 = vmatmul.mubr.f32.gmra.mrb[0].mxu0 %v1644
        %v1712 = vpop.f32.mrb[0].mxu0
        %v1713 = vadd.f32 %v1641, %v1712
        %v1714 = vpop.f32.mrb[0].mxu0
        %1715 = vdwg.mxu0
        %v1716 = vadd.f32 %v1713, %v1551
        %v1717 = vsel %vm475, %v1716, 0.0
        %1718 = vadd.xlane.f32.xlu0 %v1717
        %v1719 = vpop.xlane.xlu0 %1718
        %v1720 = vmul.f32 %v1719, %v1531
        %v1721 = vsub.f32 %v1716, %v1720
        %v1722 = vmul.f32 %v1721, %v1721
        %v1723 = vsel %vm475, %v1722, 0.0
        %1724 = vadd.xlane.f32.xlu0 %v1723
        %v1725 = vpop.xlane.xlu0 %1724
        %v1726 = vmul.f32 %v1725, %v1531
        %v1727 = vadd.f32 %v1726, 1e-12
        %v1728 = vrsqrt.pop %v1727
        %v1729 = vmul.f32 %v1721, %v1728
        %v1730 = vlaneseq
        %v1731 = vshrl.u32 %v1730, 7
        %v1732 = vsub.s32 6, %v1731
        %v1733 = vrot.slane %v470, %v1732
        %v1734 = vmul.f32 %v1729, %v1733
        %v1735 = vlaneseq
        %v1736 = vshrl.u32 %v1735, 7
        %v1737 = vsub.s32 7, %v1736
        %v1738 = vrot.slane %v470, %v1737
        %v1739 = vadd.f32 %v1734, %v1738
        %1740 = vst.msk [vmem:[%s405] sm:$0xff] %vm475, %v1739
        %s1741 = sand.u32 %s229, 1
        %s1742 = scalar_lea.sflag [#allocation4], %s1741
        %s1743 = sand.u32 %s229, 1
        %s1744 = smul.addr %s1743, 8
        %s1745 = scalar_lea.vmem [#allocation5], %s1744
        %s1746 = sand.u32 %s257, 1
        %s1747 = scalar_lea.sflag [#allocation7], %s1746
        %s1748 = sand.u32 %s257, 1
        %s1749 = scalar_lea.vmem [#allocation6], %s1748
        // Predicated region
        $region57: #{tpu_custom_call.1} parent=47 // pred_check
          %p1750 = pneg %p239
        $region58: #{tpu_custom_call.1} parent=47 // pred_check_branch
          %1752 = sbr.rel (%p1750) target = $region60
        $region59: #{tpu_custom_call.1} parent=47 // pred_region
          %s1754 = ssub.s32 128, 128
          %1755 = vsyncadd %s1742, %s1754
          %s1756 = smul.addr %s31, 128
          %s1757 = scalar_lea.hbm %s7, %s1756
          %s1759 = sshll.u32 %s1745, 4
          %s1760 = int_to_ptr.vmem [resolvable:$true] %s1759
          %1762 = dma.vmem_to_hbm [thread:$0]  %s1760, 128, %s1757, %s1742
        $region60: #{tpu_custom_call.1} parent=47 // pred_fallthru
          _
        // Predicated region
        $region61: #{tpu_custom_call.1} parent=47 // pred_check
          %p1763 = pneg %p267
        $region62: #{tpu_custom_call.1} parent=47 // pred_check_branch
          %1765 = sbr.rel (%p1763) target = $region64
        $region63: #{tpu_custom_call.1} parent=47 // pred_region
          %s1767 = ssub.s32 16, 16
          %1768 = vsyncadd %s1747, %s1767
          %s1769 = smul.addr %s31, 2
          %s1770 = sadd.s32 %s32, %s1769
          %s1771 = smul.addr %s1770, 16
          %s1772 = scalar_lea.hbm %s8, %s1771
          %s1774 = sshll.u32 %s1749, 4
          %s1775 = int_to_ptr.vmem [resolvable:$true] %s1774
          %1777 = dma.vmem_to_hbm [thread:$0]  %s1775, 16, %s1772, %s1747
        $region64: #{tpu_custom_call.1} parent=47 // pred_fallthru
          _
      $region48: #{tpu_custom_call.1} parent=5 // pred_fallthru
        _
      %p1778 = scmp.le.s32.totalorder 2, %s22
      // Predicated region
      $region65: #{tpu_custom_call.1} parent=5 // pred_check
        %p1779 = pneg %p1778
      $region66: #{tpu_custom_call.1} parent=5 // pred_check_branch
        %1781 = sbr.rel (%p1779) target = $region68
      $region67: #{tpu_custom_call.1} parent=5 // pred_region
        %s1782 = ssub.s32 %s22, 2
        // Predicated region
        $region69: #{tpu_custom_call.1} parent=67 // pred_check
          %p1783 = pneg %p245
        $region70: #{tpu_custom_call.1} parent=67 // pred_check_branch
          %1785 = sbr.rel (%p1783) target = $region72
        $region71: #{tpu_custom_call.1} parent=67 // pred_region
          %s1786 = sand.u32 %s230, 1
          %s1787 = scalar_lea.sflag [#allocation4], %s1786
          %s1788 = sand.u32 %s230, 1
          %s1789 = smul.addr %s1788, 8
          %s1790 = scalar_lea.vmem [#allocation5], %s1789
          %1791 = dma.done %s1787, 128
        $region72: #{tpu_custom_call.1} parent=67 // pred_fallthru
          _
        // Predicated region
        $region73: #{tpu_custom_call.1} parent=67 // pred_check
          %p1792 = pneg %p273
        $region74: #{tpu_custom_call.1} parent=67 // pred_check_branch
          %1794 = sbr.rel (%p1792) target = $region76
        $region75: #{tpu_custom_call.1} parent=67 // pred_region
          %s1795 = sand.u32 %s258, 1
          %s1796 = scalar_lea.sflag [#allocation7], %s1795
          %s1797 = sand.u32 %s258, 1
          %s1798 = scalar_lea.vmem [#allocation6], %s1797
          %1799 = dma.done %s1796, 16
        $region76: #{tpu_custom_call.1} parent=67 // pred_fallthru
          _
      $region68: #{tpu_custom_call.1} parent=5 // pred_fallthru
        _
    $region6: #{tpu_custom_call.1} parent=1 // loop_footer
      %s26 = sadd.s32 1, %s22
    $region7: #{tpu_custom_call.1} parent=1 // loop_footer_branch
      %21 = sbr.rel target = $region3
    $region8: #{tpu_custom_call.1} parent=1 // loop_exit
      _
    %1800 = vsyncpa [#allocation3], 1
    %s1801 = scalar_lea.sflag [#allocation3], 1
    %1802 = vsyncpa %s1801, 1
    %1803 = vsyncpa [#allocation4], 1
    %s1804 = scalar_lea.sflag [#allocation4], 1
    %1805 = vsyncpa %s1804, 1
    %1806 = vsyncpa [#allocation7], 1
    %s1807 = scalar_lea.sflag [#allocation7], 1
    %1808 = vsyncpa %s1807, 1

</llo_original>
